<compile_context>
chip_gen: v7x
topology: tpu7x:2x2x1
jax: 0.10.0
libtpu: 0.0.40
codegen_flags: <defaults>
</compile_context>

<pallas_src>
import functools

import jax
import jax.numpy as jnp
import numpy as np
from jax.experimental import pallas as pl
from jax.experimental.pallas import tpu as pltpu


# Left bones (rows 0..7) paired with right bones (rows 8..15): row i pairs
# with row i+8, matching the PyTorch abs-diff terms.
_LEFT_PAIRS = ((1, 4), (7, 4), (7, 10), (0, 1),
               (16, 18), (20, 18), (20, 22), (16, 12))
_RIGHT_PAIRS = ((2, 5), (8, 5), (8, 11), (0, 2),
                (17, 19), (21, 19), (21, 23), (17, 12))
_BONE_PAIRS = _LEFT_PAIRS + _RIGHT_PAIRS     # 16 bones total
_NUM_JOINTS = 24
_LANE = 128
_CHUNK = 2 * _LANE                           # in-kernel lane chunk (256)


def _selection_matrix():
    """(16, 24) +/-1 matrix: S @ joints -> per-bone endpoint difference."""
    s = np.zeros((len(_BONE_PAIRS), _NUM_JOINTS), np.float32)
    for row, (a, b) in enumerate(_BONE_PAIRS):
        s[row, a] += 1.0
        s[row, b] -= 1.0
    return jnp.asarray(s)


def _bone_loss_kernel(s_ref, x_ref, o_ref, *, n_true, tile_n, needs_mask):
    """s_ref: (16,24) select matrix, x_ref: (3,24,tile_n) coords,
    o_ref: (8,128) per-tile partial sums."""
    n_chunks = tile_n // _CHUNK
    sel = s_ref[...]                                  # (16, 24) f32
    base = pl.program_id(0) * tile_n                  # global lane offset of this tile

    def chunk_step(c, acc):
        start = pl.multiple_of(c * _CHUNK, _CHUNK)

        # Endpoint select + subtract on the (otherwise idle) MXU, one coord
        # at a time to keep the live vreg set small.
        def diff(coord):
            blk = x_ref[coord, :, pl.ds(start, _CHUNK)].astype(jnp.float32)
            return jnp.dot(sel, blk, preferred_element_type=jnp.float32,
                           precision=jax.lax.Precision.HIGHEST)

        dx = diff(0)
        dy = diff(1)
        dz = diff(2)
        blen = jnp.sqrt(dx * dx + dy * dy + dz * dz)   # (16, CHUNK) bone lengths
        d = jnp.abs(blen[0:8, :] - blen[8:16, :])      # (8, CHUNK) |left - right|

        if needs_mask:
            # Last (partial) block reads past the array end -> garbage lanes.
            lane = jax.lax.broadcasted_iota(jnp.int32, (8, _CHUNK), 1)
            d = jnp.where(base + start + lane < n_true, d, 0.0)

        return acc + d                                  # 2 independent acc chains

    acc = jnp.zeros((8, _CHUNK), jnp.float32)
    unroll = True if n_chunks <= 4 else 4
    acc = jax.lax.fori_loop(0, n_chunks, chunk_step, acc, unroll=unroll)

    out = acc[:, 0:_LANE]
    for k in range(1, _CHUNK // _LANE):
        out = out + acc[:, k * _LANE:(k + 1) * _LANE]
    o_ref[...] = out


def bone_loss(pred_joints, *, max_tile_n=8192):
    """pred_joints: [B, T, J, C] with J >= 24, C == 3.  Returns scalar f32."""
    B, T, J, C = pred_joints.shape
    assert C == 3 and J >= _NUM_JOINTS, (J, C)
    N = B * T

    # Single transpose pass: (N, J, 3) -> (3, 24, N); sample axis lane-dense.
    x = pred_joints.reshape(N, J, C)[:, :_NUM_JOINTS, :]
    xt = jnp.transpose(x, (2, 1, 0))

    # Only tiny inputs get padded (so block <= array); everything else relies
    # on in-kernel masking of the partial last block.
    n_lanes = N
    if n_lanes < _CHUNK:
        xt = jnp.pad(xt, ((0, 0), (0, 0), (0, _CHUNK - n_lanes)))
        n_lanes = _CHUNK

    max_tile_n = max(_CHUNK, (max_tile_n // _CHUNK) * _CHUNK)
    tile_n = min(max_tile_n, (n_lanes // _CHUNK) * _CHUNK)   # multiple of 256, <= n_lanes
    grid = pl.cdiv(n_lanes, tile_n)
    # v7x megacore: prefer >= 2 grid steps when there is enough work.
    if grid == 1 and n_lanes >= 2 * _CHUNK:
        tile_n = ((n_lanes // 2 + _CHUNK - 1) // _CHUNK) * _CHUNK
        grid = pl.cdiv(n_lanes, tile_n)
    needs_mask = (n_lanes % tile_n) != 0   # partial last block -> mask garbage lanes

    kernel = functools.partial(_bone_loss_kernel, n_true=N, tile_n=tile_n,
                               needs_mask=needs_mask)

    partial = pl.pallas_call(
        kernel,
        out_shape=jax.ShapeDtypeStruct((8, grid * _LANE), jnp.float32),
        grid_spec=pltpu.PrefetchScalarGridSpec(
            num_scalar_prefetch=0,
            grid=(grid,),
            in_specs=[
                pl.BlockSpec((16, _NUM_JOINTS), lambda i: (0, 0)),
                pl.BlockSpec((3, _NUM_JOINTS, tile_n), lambda i: (0, 0, i)),
            ],
            out_specs=pl.BlockSpec((8, _LANE), lambda i: (0, i)),
        ),
        compiler_params=pltpu.CompilerParams(
            dimension_semantics=("parallel",),
            vmem_limit_bytes=32 * 1024 * 1024,
        ),
    )(_selection_matrix(), xt)

    # Finish in JAX: fold /4 scaling + mean over the TRUE number of samples.
    return jnp.sum(partial) * (0.25 / N)


def bone_loss_ref(pred_joints):
    """Pure-JAX reference mirroring the PyTorch forward, for validation."""
    x = pred_joints.astype(jnp.float32)

    def joint(idx):
        return x[:, :, idx, :]

    def bone_len(a, b):
        return jnp.linalg.norm(a - b, axis=-1)

    dis_leg = (jnp.abs(bone_len(joint(1), joint(4)) - bone_len(joint(2), joint(5)))
               + jnp.abs(bone_len(joint(7), joint(4)) - bone_len(joint(8), joint(5)))
               + jnp.abs(bone_len(joint(7), joint(10)) - bone_len(joint(8), joint(11)))
               + jnp.abs(bone_len(joint(0), joint(1)) - bone_len(joint(0), joint(2))))
    dis_arm = (jnp.abs(bone_len(joint(16), joint(18)) - bone_len(joint(17), joint(19)))
               + jnp.abs(bone_len(joint(20), joint(18)) - bone_len(joint(21), joint(19)))
               + jnp.abs(bone_len(joint(20), joint(22)) - bone_len(joint(21), joint(23)))
               + jnp.abs(bone_len(joint(16), joint(12)) - bone_len(joint(17), joint(12))))
    return jnp.mean(dis_arm / 4.0 + dis_leg / 4.0)


if __name__ == "__main__":
    key = jax.random.PRNGKey(0)
    # B=2 sequences, T=8 frames, J=24 joints, C=3 coordinates
    pred_joints = jax.random.normal(key, (2, 8, 24, 3), dtype=jnp.float32)

    out = jax.block_until_ready(bone_loss(pred_joints))
    ref = jax.block_until_ready(bone_loss_ref(pred_joints))
    assert jnp.allclose(out, ref, rtol=1e-5, atol=1e-5), (out, ref)

    # Larger case: exercises the grid>=2 split plus in-kernel tail masking.
    key2 = jax.random.PRNGKey(1)
    big = jax.random.normal(key2, (4, 300, 24, 3), dtype=jnp.float32)
    ref_big = jax.block_until_ready(bone_loss_ref(big))
    out_big = jax.block_until_ready(bone_loss(big))
    assert jnp.allclose(out_big, ref_big, rtol=1e-5, atol=1e-5), (out_big, ref_big)

    # Multi-tile grid with small tiles (also masked last block).
    out_small_tiles = jax.block_until_ready(bone_loss(big, max_tile_n=512))
    assert jnp.allclose(out_small_tiles, ref_big, rtol=1e-5, atol=1e-5), (
        out_small_tiles, ref_big)

    print("KERNEL_OK")
</pallas_src>

<mosaic_0001>
module attributes {stable_mosaic.version = 11 : i64} {
  func.func @_bone_loss_kernel(%arg0: i32, %arg1: memref<16x24xf32, #tpu.memory_space<vmem>>, %arg2: memref<3x24x256xf32, #tpu.memory_space<vmem>>, %arg3: memref<8x128xf32, #tpu.memory_space<vmem>>) attributes {dimension_semantics = [#tpu.dimension_semantics<parallel>], iteration_bounds = array<i64: 1>, scalar_prefetch = 0 : i64, scratch_operands = 0 : i64, tpu.core_type = #tpu.core_type<tc>, window_params = [{pipeline_mode = #tpu.pipeline_mode<synchronous>, transform_indices = @transform_0, window_bounds = array<i64: 16, 24>}, {transform_indices = @transform_1, window_bounds = array<i64: 3, 24, 256>}, {transform_indices = @transform_2, window_bounds = array<i64: 8, 128>}]} {
    %c0 = arith.constant 0 : index
    %c0_0 = arith.constant 0 : index
    %0 = vector.load %arg1[%c0, %c0_0] : memref<16x24xf32, #tpu.memory_space<vmem>>, vector<16x24xf32>
    %cst = arith.constant 0.000000e+00 : f32
    %1 = vector.broadcast %cst : f32 to vector<8x256xf32>
    %c0_i32 = arith.constant 0 : i32
    %c256_i32 = arith.constant 256 : i32
    %2 = arith.muli %c0_i32, %c256_i32 : i32
    %3 = tpu.assume_multiple %2, 256 : i32
    %c0_1 = arith.constant 0 : index
    %c0_2 = arith.constant 0 : index
    %4 = arith.index_cast %3 : i32 to index
    %5 = vector.load %arg2[%c0_1, %c0_2, %4] : memref<3x24x256xf32, #tpu.memory_space<vmem>>, vector<1x24x256xf32>
    %6 = vector.shape_cast %5 : vector<1x24x256xf32> to vector<24x256xf32>
    %cst_3 = arith.constant dense<0.000000e+00> : vector<16x256xf32>
    %7 = tpu.matmul %0, %6, %cst_3 {dimension_numbers = #tpu.dot_dimension_numbers<[1], [0], [0], [1], [0, 0, 1, 1], [], []>, precision = #tpu.contract_precision<fp32>} : vector<16x24xf32>, vector<24x256xf32>, vector<16x256xf32> -> vector<16x256xf32>
    %c1 = arith.constant 1 : index
    %c0_4 = arith.constant 0 : index
    %8 = arith.index_cast %3 : i32 to index
    %9 = vector.load %arg2[%c1, %c0_4, %8] : memref<3x24x256xf32, #tpu.memory_space<vmem>>, vector<1x24x256xf32>
    %10 = vector.shape_cast %9 : vector<1x24x256xf32> to vector<24x256xf32>
    %cst_5 = arith.constant dense<0.000000e+00> : vector<16x256xf32>
    %11 = tpu.matmul %0, %10, %cst_5 {dimension_numbers = #tpu.dot_dimension_numbers<[1], [0], [0], [1], [0, 0, 1, 1], [], []>, precision = #tpu.contract_precision<fp32>} : vector<16x24xf32>, vector<24x256xf32>, vector<16x256xf32> -> vector<16x256xf32>
    %c2 = arith.constant 2 : index
    %c0_6 = arith.constant 0 : index
    %12 = arith.index_cast %3 : i32 to index
    %13 = vector.load %arg2[%c2, %c0_6, %12] : memref<3x24x256xf32, #tpu.memory_space<vmem>>, vector<1x24x256xf32>
    %14 = vector.shape_cast %13 : vector<1x24x256xf32> to vector<24x256xf32>
    %cst_7 = arith.constant dense<0.000000e+00> : vector<16x256xf32>
    %15 = tpu.matmul %0, %14, %cst_7 {dimension_numbers = #tpu.dot_dimension_numbers<[1], [0], [0], [1], [0, 0, 1, 1], [], []>, precision = #tpu.contract_precision<fp32>} : vector<16x24xf32>, vector<24x256xf32>, vector<16x256xf32> -> vector<16x256xf32>
    %16 = arith.mulf %7, %7 : vector<16x256xf32>
    %17 = arith.mulf %11, %11 : vector<16x256xf32>
    %18 = arith.addf %16, %17 : vector<16x256xf32>
    %19 = arith.mulf %15, %15 : vector<16x256xf32>
    %20 = arith.addf %18, %19 : vector<16x256xf32>
    %21 = math.sqrt %20 : vector<16x256xf32>
    %22 = vector.extract_strided_slice %21 {offsets = [0, 0], sizes = [8, 256], strides = [1, 1]} : vector<16x256xf32> to vector<8x256xf32>
    %23 = vector.extract_strided_slice %21 {offsets = [8, 0], sizes = [8, 256], strides = [1, 1]} : vector<16x256xf32> to vector<8x256xf32>
    %24 = arith.subf %22, %23 : vector<8x256xf32>
    %25 = math.absf %24 : vector<8x256xf32>
    %26 = arith.addf %1, %25 : vector<8x256xf32>
    %c1_i32 = arith.constant 1 : i32
    %27 = vector.extract_strided_slice %26 {offsets = [0, 0], sizes = [8, 128], strides = [1, 1]} : vector<8x256xf32> to vector<8x128xf32>
    %28 = vector.extract_strided_slice %26 {offsets = [0, 128], sizes = [8, 128], strides = [1, 1]} : vector<8x256xf32> to vector<8x128xf32>
    %29 = arith.addf %27, %28 : vector<8x128xf32>
    %c0_8 = arith.constant 0 : index
    %c0_9 = arith.constant 0 : index
    %30 = vector.load %arg3[%c0_8, %c0_9] : memref<8x128xf32, #tpu.memory_space<vmem>>, vector<8x128xf32>
    tpu.vector_store %arg3[%c0_8, %c0_9], %29 {strides = array<i32>} : memref<8x128xf32, #tpu.memory_space<vmem>>, vector<8x128xf32>,
    return
  }
  func.func @transform_0(%arg0: i32) -> (i32, i32) {
    %c0_i32 = arith.constant 0 : i32
    %c0_i32_0 = arith.constant 0 : i32
    %c0_i32_1 = arith.constant 0 : i32
    return %c0_i32, %c0_i32_0 : i32, i32
  }
  func.func @transform_1(%arg0: i32) -> (i32, i32, i32) {
    %c0_i32 = arith.constant 0 : i32
    %c0_i32_0 = arith.constant 0 : i32
    %c0_i32_1 = arith.constant 0 : i32
    return %c0_i32, %c0_i32_0, %arg0 : i32, i32, i32
  }
  func.func @transform_2(%arg0: i32) -> (i32, i32) {
    %c0_i32 = arith.constant 0 : i32
    %c0_i32_0 = arith.constant 0 : i32
    return %c0_i32, %arg0 : i32, i32
  }
}

</mosaic_0001>

<llo_original>
// kernel: tpu_custom_call.1
$region0: #{tpu_custom_call.1}
  #allocation0 [shape = 'u32[]', space=smem, size = 0x4, offset = 0x4, fixed_abs, tag = 'smem constant byte address 0x4 - core index']
  #allocation1 [shape = 'u32[144,128]{1,0:T(1,128)}', space=vmem, size = 0x12000, scoped, tag = 'internal scratch']
  %s0 = inlined_call_operand.hbm [shape: f32[16,24], index: 0, kind: input, shape index: {}]
  %s1 = inlined_call_operand.hbm [shape: f32[3,24,256], index: 1, kind: input, shape index: {}]
  %s2 = inlined_call_operand.hbm [shape: f32[8,128], index: 2, kind: output, shape index: {}]
  %s3 = sld [smem:[#allocation0]]
  $region26: #{tpu_custom_call.1} parent=0
    _
  %s5 = ssub.s32 1, %s3
  %s6 = scalar_select 0, %s5, %s3
  $region1: #{tpu_custom_call.1} parent=0
    #allocation2 [shape = 'u8[8192]{0}', space=vmem, size = 0x2000, scoped, tag = 'input window, operand 0, single buffered']
    #allocation3 [shape = 's32[1]{0}', space=sflag, size = 0x4, scoped, tag = 'scoped memory for tpu_custom_call.1']
    #allocation4 [shape = 's32[1]{0}', space=sflag, size = 0x4, scoped, tag = 'scoped memory for tpu_custom_call.1']
    #allocation5 [shape = 'u8[73728]{0}', space=vmem, size = 0x12000, scoped, tag = 'input window, operand 1, single buffered']
    #allocation6 [shape = 's32[1]{0}', space=sflag, size = 0x4, scoped, tag = 'scoped memory for tpu_custom_call.1']
    #allocation7 [shape = 'u8[4096]{0}', space=vmem, size = 0x1000, scoped, tag = 'output window, operand 0, single buffered']
    %7 = vsyncpa [#allocation3], 0
    %8 = vsyncpa [#allocation6], 0
    %9 = vsyncpa [#allocation4], 0
    // Predicated region
    $region2: #{tpu_custom_call.1} parent=1 // pred_check
      _
    $region3: #{tpu_custom_call.1} parent=1 // pred_check_branch
      %11 = sbr.rel (0) target = $region5
    $region4: #{tpu_custom_call.1} parent=1 // pred_region
      %s13 = ssub.s32 256, 256
      %14 = vsyncadd [#allocation3], %s13
      %s15 = sshll.u32 [#allocation2], 4
      %s16 = int_to_ptr.vmem [resolvable:$true] %s15
      %21 = dma.hbm_to_vmem [thread:$0]  %s0, 256, %s16, [#allocation3], 128, 128, 8
    $region5: #{tpu_custom_call.1} parent=1 // pred_fallthru
      _
    // Predicated region
    $region6: #{tpu_custom_call.1} parent=1 // pred_check
      _
    $region7: #{tpu_custom_call.1} parent=1 // pred_check_branch
      %23 = sbr.rel (0) target = $region9
    $region8: #{tpu_custom_call.1} parent=1 // pred_region
      %s25 = ssub.s32 2304, 2304
      %26 = vsyncadd [#allocation6], %s25
      %s27 = sshll.u32 [#allocation5], 4
      %s28 = int_to_ptr.vmem [resolvable:$true] %s27
      %33 = dma.hbm_to_vmem [thread:$0]  %s1, 2304, %s28, [#allocation6], 256, 256, 16
    $region9: #{tpu_custom_call.1} parent=1 // pred_fallthru
      _
    // Predicated region
    $region10: #{tpu_custom_call.1} parent=1 // pred_check
      _
    $region11: #{tpu_custom_call.1} parent=1 // pred_check_branch
      %35 = sbr.rel (0) target = $region13
    $region12: #{tpu_custom_call.1} parent=1 // pred_region
      %36 = dma.done [#allocation3], 256
    $region13: #{tpu_custom_call.1} parent=1 // pred_fallthru
      _
    // Predicated region
    $region14: #{tpu_custom_call.1} parent=1 // pred_check
      _
    $region15: #{tpu_custom_call.1} parent=1 // pred_check_branch
      %38 = sbr.rel (0) target = $region17
    $region16: #{tpu_custom_call.1} parent=1 // pred_region
      %39 = dma.done [#allocation6], 2304
    $region17: #{tpu_custom_call.1} parent=1 // pred_fallthru
      _
    %v40 = vld [vmem:[#allocation2] sm:$0xff]
    %v41 = vld [vmem:[#allocation2 + $0x8] sm:$0xff]
    %v42 = vld [vmem:[#allocation5] sm:$0xff]
    %v43 = vld [vmem:[#allocation5 + $0x8] sm:$0xff]
    %v44 = vld [vmem:[#allocation5 + $0x10] sm:$0xff]
    %v45 = vld [vmem:[#allocation5 + $0x18] sm:$0xff]
    %v46 = vld [vmem:[#allocation5 + $0x20] sm:$0xff]
    %v47 = vld [vmem:[#allocation5 + $0x28] sm:$0xff]
    %vm48 = vcmask 195584
    %v50 = vsel %vm48, %v40, 0
    %v53 = vsel %vm48, %v41, 0
    %v55 = vand.u32 %v43, 4294901760
    %56 = vmatprep.subr.mxu0 %v55
    %v57 = vand.u32 %v42, 4294901760
    %58 = vmatpush1.msra.mxu0 %v57
    %v59 = vand.u32 %v45, 4294901760
    %60 = vmatprep.subr.mxu0 %v59
    %v61 = vand.u32 %v44, 4294901760
    %62 = vmatpush1.msra.mxu0 %v61
    %v63 = vand.u32 %v47, 4294901760
    %64 = vmatprep.subr.mxu0 %v63
    %v65 = vand.u32 %v46, 4294901760
    %66 = vmatpush1.msra.mxu0 %v65
    %67 = vmatprep.subr.mxu0 0.0
    %68 = vmatpush1.msra.mxu0 0.0
    %69 = vmatprep.subr.mxu0 0.0
    %70 = vmatpush1.msra.mxu0 0.0
    %71 = vmatprep.subr.mxu0 0.0
    %72 = vmatpush1.msra.mxu0 0.0
    %73 = vmatprep.subr.mxu0 0.0
    %74 = vmatpush1.msra.mxu0 0.0
    %75 = vmatprep.subr.mxu0 0.0
    %76 = vmatpush1.msra.mxu0 0.0
    %77 = vmatprep.subr.mxu0 0.0
    %78 = vmatpush1.msra.mxu0 0.0
    %79 = vmatprep.subr.mxu0 0.0
    %80 = vmatpush1.msra.mxu0 0.0
    %81 = vmatprep.subr.mxu0 0.0
    %82 = vmatpush1.msra.mxu0 0.0
    %83 = vmatprep.subr.mxu0 0.0
    %84 = vmatpush1.msra.mxu0 0.0
    %85 = vmatprep.subr.mxu0 0.0
    %86 = vmatpush1.msra.mxu0 0.0
    %87 = vmatprep.subr.mxu0 0.0
    %88 = vmatpush1.msra.mxu0 0.0
    %89 = vmatprep.subr.mxu0 0.0
    %90 = vmatpush1.msra.mxu0 0.0
    %91 = vmatprep.subr.mxu0 0.0
    %92 = vmatpush1.msra.mxu0 0.0
    %93 = vmatprep.subr.mxu0 0.0
    %94 = vmatpush1.msra.mxu0 0.0
    %95 = vmatprep.subr.mxu0 0.0
    %96 = vmatpush1.msra.mxu0 0.0
    %97 = vmatprep.subr.mxu0 0.0
    %98 = vmatpush1.msra.mxu0 0.0
    %99 = vmatprep.subr.mxu0 0.0
    %100 = vmatpush1.msra.mxu0 0.0
    %101 = vmatprep.subr.mxu0 0.0
    %102 = vmatpush1.msra.mxu0 0.0
    %103 = vmatprep.subr.mxu0 0.0
    %104 = vmatpush1.msra.mxu0 0.0
    %105 = vmatprep.subr.mxu0 0.0
    %106 = vmatpush1.msra.mxu0 0.0
    %107 = vmatprep.subr.mxu0 0.0
    %108 = vmatpush1.msra.mxu0 0.0
    %109 = vmatprep.subr.mxu0 0.0
    %110 = vmatpush1.msra.mxu0 0.0
    %111 = vmatprep.subr.mxu0 0.0
    %112 = vmatpush1.msra.mxu0 0.0
    %113 = vmatprep.subr.mxu0 0.0
    %114 = vmatpush1.msra.mxu0 0.0
    %115 = vmatprep.subr.mxu0 0.0
    %116 = vmatpush1.msra.mxu0 0.0
    %117 = vmatprep.subr.mxu0 0.0
    %118 = vmatpush1.msra.mxu0 0.0
    %119 = vmatprep.subr.mxu0 0.0
    %120 = vmatpush1.msra.mxu0 0.0
    %121 = vmatprep.subr.mxu0 0.0
    %122 = vmatpush1.msra.mxu0 0.0
    %123 = vmatprep.subr.mxu0 0.0
    %124 = vmatpush1.msra.mxu0 0.0
    %125 = vmatprep.mubr.f32.mxu0 0.0
    %v126 = vand.u32 %v50, 4294901760
    %v127 = vsub.f32 %v50, %v126
    %v128 = vand.u32 %v127, 4294901760
    %v129 = vsub.f32 %v127, %v128
    %v130 = vand.u32 %v129, 4294901760
    %131 = vmatmul.mubr.f32.gmra.mrb[0].mxu0 %v130
    %v132 = vpop.f32.mrb[0].mxu0
    %v133 = vadd.f32 0.0, %v132
    %v134 = vpop.f32.mrb[0].mxu0
    %v135 = vadd.f32 0.0, %v134
    %136 = vmatprep.mubr.f32.mxu0 0.0
    %v137 = vand.u32 %v53, 4294901760
    %v138 = vsub.f32 %v53, %v137
    %v139 = vand.u32 %v138, 4294901760
    %v140 = vsub.f32 %v138, %v139
    %v141 = vand.u32 %v140, 4294901760
    %142 = vmatmul.mubr.f32.gmra.mrb[0].mxu0 %v141
    %v143 = vpop.f32.mrb[0].mxu0
    %v144 = vadd.f32 0.0, %v143
    %v145 = vpop.f32.mrb[0].mxu0
    %v146 = vadd.f32 0.0, %v145
    %147 = vdwg.mxu0
    %v148 = vand.u32 %v43, 4294901760
    %v149 = vsub.f32 %v43, %v148
    %v150 = vand.u32 %v149, 4294901760
    %v151 = vsub.f32 %v149, %v150
    %v152 = vand.u32 %v151, 4294901760
    %153 = vmatprep.subr.mxu0 %v152
    %v154 = vand.u32 %v42, 4294901760
    %v155 = vsub.f32 %v42, %v154
    %v156 = vand.u32 %v155, 4294901760
    %v157 = vsub.f32 %v155, %v156
    %v158 = vand.u32 %v157, 4294901760
    %159 = vmatpush1.msra.mxu0 %v158
    %v160 = vand.u32 %v45, 4294901760
    %v161 = vsub.f32 %v45, %v160
    %v162 = vand.u32 %v161, 4294901760
    %v163 = vsub.f32 %v161, %v162
    %v164 = vand.u32 %v163, 4294901760
    %165 = vmatprep.subr.mxu0 %v164
    %v166 = vand.u32 %v44, 4294901760
    %v167 = vsub.f32 %v44, %v166
    %v168 = vand.u32 %v167, 4294901760
    %v169 = vsub.f32 %v167, %v168
    %v170 = vand.u32 %v169, 4294901760
    %171 = vmatpush1.msra.mxu0 %v170
    %v172 = vand.u32 %v47, 4294901760
    %v173 = vsub.f32 %v47, %v172
    %v174 = vand.u32 %v173, 4294901760
    %v175 = vsub.f32 %v173, %v174
    %v176 = vand.u32 %v175, 4294901760
    %177 = vmatprep.subr.mxu0 %v176
    %v178 = vand.u32 %v46, 4294901760
    %v179 = vsub.f32 %v46, %v178
    %v180 = vand.u32 %v179, 4294901760
    %v181 = vsub.f32 %v179, %v180
    %v182 = vand.u32 %v181, 4294901760
    %183 = vmatpush1.msra.mxu0 %v182
    %184 = vmatprep.subr.mxu0 0.0
    %185 = vmatpush1.msra.mxu0 0.0
    %186 = vmatprep.subr.mxu0 0.0
    %187 = vmatpush1.msra.mxu0 0.0
    %188 = vmatprep.subr.mxu0 0.0
    %189 = vmatpush1.msra.mxu0 0.0
    %190 = vmatprep.subr.mxu0 0.0
    %191 = vmatpush1.msra.mxu0 0.0
    %192 = vmatprep.subr.mxu0 0.0
    %193 = vmatpush1.msra.mxu0 0.0
    %194 = vmatprep.subr.mxu0 0.0
    %195 = vmatpush1.msra.mxu0 0.0
    %196 = vmatprep.subr.mxu0 0.0
    %197 = vmatpush1.msra.mxu0 0.0
    %198 = vmatprep.subr.mxu0 0.0
    %199 = vmatpush1.msra.mxu0 0.0
    %200 = vmatprep.subr.mxu0 0.0
    %201 = vmatpush1.msra.mxu0 0.0
    %202 = vmatprep.subr.mxu0 0.0
    %203 = vmatpush1.msra.mxu0 0.0
    %204 = vmatprep.subr.mxu0 0.0
    %205 = vmatpush1.msra.mxu0 0.0
    %206 = vmatprep.subr.mxu0 0.0
    %207 = vmatpush1.msra.mxu0 0.0
    %208 = vmatprep.subr.mxu0 0.0
    %209 = vmatpush1.msra.mxu0 0.0
    %210 = vmatprep.subr.mxu0 0.0
    %211 = vmatpush1.msra.mxu0 0.0
    %212 = vmatprep.subr.mxu0 0.0
    %213 = vmatpush1.msra.mxu0 0.0
    %214 = vmatprep.subr.mxu0 0.0
    %215 = vmatpush1.msra.mxu0 0.0
    %216 = vmatprep.subr.mxu0 0.0
    %217 = vmatpush1.msra.mxu0 0.0
    %218 = vmatprep.subr.mxu0 0.0
    %219 = vmatpush1.msra.mxu0 0.0
    %220 = vmatprep.subr.mxu0 0.0
    %221 = vmatpush1.msra.mxu0 0.0
    %222 = vmatprep.subr.mxu0 0.0
    %223 = vmatpush1.msra.mxu0 0.0
    %224 = vmatprep.subr.mxu0 0.0
    %225 = vmatpush1.msra.mxu0 0.0
    %226 = vmatprep.subr.mxu0 0.0
    %227 = vmatpush1.msra.mxu0 0.0
    %228 = vmatprep.subr.mxu0 0.0
    %229 = vmatpush1.msra.mxu0 0.0
    %230 = vmatprep.subr.mxu0 0.0
    %231 = vmatpush1.msra.mxu0 0.0
    %232 = vmatprep.subr.mxu0 0.0
    %233 = vmatpush1.msra.mxu0 0.0
    %234 = vmatprep.subr.mxu0 0.0
    %235 = vmatpush1.msra.mxu0 0.0
    %236 = vmatprep.subr.mxu0 0.0
    %237 = vmatpush1.msra.mxu0 0.0
    %238 = vmatprep.subr.mxu0 0.0
    %239 = vmatpush1.msra.mxu0 0.0
    %240 = vmatprep.subr.mxu0 0.0
    %241 = vmatpush1.msra.mxu0 0.0
    %242 = vmatprep.mubr.f32.mxu0 0.0
    %v243 = vand.u32 %v50, 4294901760
    %244 = vmatmul.mubr.f32.gmra.mrb[0].mxu0 %v243
    %v245 = vpop.f32.mrb[0].mxu0
    %v246 = vadd.f32 %v133, %v245
    %v247 = vpop.f32.mrb[0].mxu0
    %v248 = vadd.f32 %v135, %v247
    %249 = vmatprep.mubr.f32.mxu0 0.0
    %v250 = vand.u32 %v53, 4294901760
    %251 = vmatmul.mubr.f32.gmra.mrb[0].mxu0 %v250
    %v252 = vpop.f32.mrb[0].mxu0
    %v253 = vadd.f32 %v144, %v252
    %v254 = vpop.f32.mrb[0].mxu0
    %v255 = vadd.f32 %v146, %v254
    %256 = vdwg.mxu0
    %v257 = vand.u32 %v43, 4294901760
    %v258 = vsub.f32 %v43, %v257
    %259 = vmatprep.subr.mxu0 %v258
    %v260 = vand.u32 %v42, 4294901760
    %v261 = vsub.f32 %v42, %v260
    %262 = vmatpush1.msra.mxu0 %v261
    %v263 = vand.u32 %v45, 4294901760
    %v264 = vsub.f32 %v45, %v263
    %265 = vmatprep.subr.mxu0 %v264
    %v266 = vand.u32 %v44, 4294901760
    %v267 = vsub.f32 %v44, %v266
    %268 = vmatpush1.msra.mxu0 %v267
    %v269 = vand.u32 %v47, 4294901760
    %v270 = vsub.f32 %v47, %v269
    %271 = vmatprep.subr.mxu0 %v270
    %v272 = vand.u32 %v46, 4294901760
    %v273 = vsub.f32 %v46, %v272
    %274 = vmatpush1.msra.mxu0 %v273
    %275 = vmatprep.subr.mxu0 0.0
    %276 = vmatpush1.msra.mxu0 0.0
    %277 = vmatprep.subr.mxu0 0.0
    %278 = vmatpush1.msra.mxu0 0.0
    %279 = vmatprep.subr.mxu0 0.0
    %280 = vmatpush1.msra.mxu0 0.0
    %281 = vmatprep.subr.mxu0 0.0
    %282 = vmatpush1.msra.mxu0 0.0
    %283 = vmatprep.subr.mxu0 0.0
    %284 = vmatpush1.msra.mxu0 0.0
    %285 = vmatprep.subr.mxu0 0.0
    %286 = vmatpush1.msra.mxu0 0.0
    %287 = vmatprep.subr.mxu0 0.0
    %288 = vmatpush1.msra.mxu0 0.0
    %289 = vmatprep.subr.mxu0 0.0
    %290 = vmatpush1.msra.mxu0 0.0
    %291 = vmatprep.subr.mxu0 0.0
    %292 = vmatpush1.msra.mxu0 0.0
    %293 = vmatprep.subr.mxu0 0.0
    %294 = vmatpush1.msra.mxu0 0.0
    %295 = vmatprep.subr.mxu0 0.0
    %296 = vmatpush1.msra.mxu0 0.0
    %297 = vmatprep.subr.mxu0 0.0
    %298 = vmatpush1.msra.mxu0 0.0
    %299 = vmatprep.subr.mxu0 0.0
    %300 = vmatpush1.msra.mxu0 0.0
    %301 = vmatprep.subr.mxu0 0.0
    %302 = vmatpush1.msra.mxu0 0.0
    %303 = vmatprep.subr.mxu0 0.0
    %304 = vmatpush1.msra.mxu0 0.0
    %305 = vmatprep.subr.mxu0 0.0
    %306 = vmatpush1.msra.mxu0 0.0
    %307 = vmatprep.subr.mxu0 0.0
    %308 = vmatpush1.msra.mxu0 0.0
    %309 = vmatprep.subr.mxu0 0.0
    %310 = vmatpush1.msra.mxu0 0.0
    %311 = vmatprep.subr.mxu0 0.0
    %312 = vmatpush1.msra.mxu0 0.0
    %313 = vmatprep.subr.mxu0 0.0
    %314 = vmatpush1.msra.mxu0 0.0
    %315 = vmatprep.subr.mxu0 0.0
    %316 = vmatpush1.msra.mxu0 0.0
    %317 = vmatprep.subr.mxu0 0.0
    %318 = vmatpush1.msra.mxu0 0.0
    %319 = vmatprep.subr.mxu0 0.0
    %320 = vmatpush1.msra.mxu0 0.0
    %321 = vmatprep.subr.mxu0 0.0
    %322 = vmatpush1.msra.mxu0 0.0
    %323 = vmatprep.subr.mxu0 0.0
    %324 = vmatpush1.msra.mxu0 0.0
    %325 = vmatprep.subr.mxu0 0.0
    %326 = vmatpush1.msra.mxu0 0.0
    %327 = vmatprep.subr.mxu0 0.0
    %328 = vmatpush1.msra.mxu0 0.0
    %329 = vmatprep.subr.mxu0 0.0
    %330 = vmatpush1.msra.mxu0 0.0
    %331 = vmatprep.subr.mxu0 0.0
    %332 = vmatpush1.msra.mxu0 0.0
    %333 = vmatprep.mubr.f32.mxu0 0.0
    %v334 = vand.u32 %v50, 4294901760
    %v335 = vsub.f32 %v50, %v334
    %336 = vmatmul.mubr.f32.gmra.mrb[0].mxu0 %v335
    %v337 = vpop.f32.mrb[0].mxu0
    %v338 = vadd.f32 %v246, %v337
    %v339 = vpop.f32.mrb[0].mxu0
    %v340 = vadd.f32 %v248, %v339
    %341 = vmatprep.mubr.f32.mxu0 0.0
    %v342 = vand.u32 %v53, 4294901760
    %v343 = vsub.f32 %v53, %v342
    %344 = vmatmul.mubr.f32.gmra.mrb[0].mxu0 %v343
    %v345 = vpop.f32.mrb[0].mxu0
    %v346 = vadd.f32 %v253, %v345
    %v347 = vpop.f32.mrb[0].mxu0
    %v348 = vadd.f32 %v255, %v347
    %349 = vdwg.mxu0
    %v350 = vand.u32 %v43, 4294901760
    %351 = vmatprep.subr.mxu0 %v350
    %v352 = vand.u32 %v42, 4294901760
    %353 = vmatpush1.msra.mxu0 %v352
    %v354 = vand.u32 %v45, 4294901760
    %355 = vmatprep.subr.mxu0 %v354
    %v356 = vand.u32 %v44, 4294901760
    %357 = vmatpush1.msra.mxu0 %v356
    %v358 = vand.u32 %v47, 4294901760
    %359 = vmatprep.subr.mxu0 %v358
    %v360 = vand.u32 %v46, 4294901760
    %361 = vmatpush1.msra.mxu0 %v360
    %362 = vmatprep.subr.mxu0 0.0
    %363 = vmatpush1.msra.mxu0 0.0
    %364 = vmatprep.subr.mxu0 0.0
    %365 = vmatpush1.msra.mxu0 0.0
    %366 = vmatprep.subr.mxu0 0.0
    %367 = vmatpush1.msra.mxu0 0.0
    %368 = vmatprep.subr.mxu0 0.0
    %369 = vmatpush1.msra.mxu0 0.0
    %370 = vmatprep.subr.mxu0 0.0
    %371 = vmatpush1.msra.mxu0 0.0
    %372 = vmatprep.subr.mxu0 0.0
    %373 = vmatpush1.msra.mxu0 0.0
    %374 = vmatprep.subr.mxu0 0.0
    %375 = vmatpush1.msra.mxu0 0.0
    %376 = vmatprep.subr.mxu0 0.0
    %377 = vmatpush1.msra.mxu0 0.0
    %378 = vmatprep.subr.mxu0 0.0
    %379 = vmatpush1.msra.mxu0 0.0
    %380 = vmatprep.subr.mxu0 0.0
    %381 = vmatpush1.msra.mxu0 0.0
    %382 = vmatprep.subr.mxu0 0.0
    %383 = vmatpush1.msra.mxu0 0.0
    %384 = vmatprep.subr.mxu0 0.0
    %385 = vmatpush1.msra.mxu0 0.0
    %386 = vmatprep.subr.mxu0 0.0
    %387 = vmatpush1.msra.mxu0 0.0
    %388 = vmatprep.subr.mxu0 0.0
    %389 = vmatpush1.msra.mxu0 0.0
    %390 = vmatprep.subr.mxu0 0.0
    %391 = vmatpush1.msra.mxu0 0.0
    %392 = vmatprep.subr.mxu0 0.0
    %393 = vmatpush1.msra.mxu0 0.0
    %394 = vmatprep.subr.mxu0 0.0
    %395 = vmatpush1.msra.mxu0 0.0
    %396 = vmatprep.subr.mxu0 0.0
    %397 = vmatpush1.msra.mxu0 0.0
    %398 = vmatprep.subr.mxu0 0.0
    %399 = vmatpush1.msra.mxu0 0.0
    %400 = vmatprep.subr.mxu0 0.0
    %401 = vmatpush1.msra.mxu0 0.0
    %402 = vmatprep.subr.mxu0 0.0
    %403 = vmatpush1.msra.mxu0 0.0
    %404 = vmatprep.subr.mxu0 0.0
    %405 = vmatpush1.msra.mxu0 0.0
    %406 = vmatprep.subr.mxu0 0.0
    %407 = vmatpush1.msra.mxu0 0.0
    %408 = vmatprep.subr.mxu0 0.0
    %409 = vmatpush1.msra.mxu0 0.0
    %410 = vmatprep.subr.mxu0 0.0
    %411 = vmatpush1.msra.mxu0 0.0
    %412 = vmatprep.subr.mxu0 0.0
    %413 = vmatpush1.msra.mxu0 0.0
    %414 = vmatprep.subr.mxu0 0.0
    %415 = vmatpush1.msra.mxu0 0.0
    %416 = vmatprep.subr.mxu0 0.0
    %417 = vmatpush1.msra.mxu0 0.0
    %418 = vmatprep.subr.mxu0 0.0
    %419 = vmatpush1.msra.mxu0 0.0
    %420 = vmatprep.mubr.f32.mxu0 0.0
    %v421 = vand.u32 %v50, 4294901760
    %v422 = vsub.f32 %v50, %v421
    %v423 = vand.u32 %v422, 4294901760
    %424 = vmatmul.mubr.f32.gmra.mrb[0].mxu0 %v423
    %v425 = vpop.f32.mrb[0].mxu0
    %v426 = vadd.f32 %v338, %v425
    %v427 = vpop.f32.mrb[0].mxu0
    %v428 = vadd.f32 %v340, %v427
    %429 = vmatprep.mubr.f32.mxu0 0.0
    %v430 = vand.u32 %v53, 4294901760
    %v431 = vsub.f32 %v53, %v430
    %v432 = vand.u32 %v431, 4294901760
    %433 = vmatmul.mubr.f32.gmra.mrb[0].mxu0 %v432
    %v434 = vpop.f32.mrb[0].mxu0
    %v435 = vadd.f32 %v346, %v434
    %v436 = vpop.f32.mrb[0].mxu0
    %v437 = vadd.f32 %v348, %v436
    %438 = vdwg.mxu0
    %v439 = vand.u32 %v43, 4294901760
    %v440 = vsub.f32 %v43, %v439
    %v441 = vand.u32 %v440, 4294901760
    %442 = vmatprep.subr.mxu0 %v441
    %v443 = vand.u32 %v42, 4294901760
    %v444 = vsub.f32 %v42, %v443
    %v445 = vand.u32 %v444, 4294901760
    %446 = vmatpush1.msra.mxu0 %v445
    %v447 = vand.u32 %v45, 4294901760
    %v448 = vsub.f32 %v45, %v447
    %v449 = vand.u32 %v448, 4294901760
    %450 = vmatprep.subr.mxu0 %v449
    %v451 = vand.u32 %v44, 4294901760
    %v452 = vsub.f32 %v44, %v451
    %v453 = vand.u32 %v452, 4294901760
    %454 = vmatpush1.msra.mxu0 %v453
    %v455 = vand.u32 %v47, 4294901760
    %v456 = vsub.f32 %v47, %v455
    %v457 = vand.u32 %v456, 4294901760
    %458 = vmatprep.subr.mxu0 %v457
    %v459 = vand.u32 %v46, 4294901760
    %v460 = vsub.f32 %v46, %v459
    %v461 = vand.u32 %v460, 4294901760
    %462 = vmatpush1.msra.mxu0 %v461
    %463 = vmatprep.subr.mxu0 0.0
    %464 = vmatpush1.msra.mxu0 0.0
    %465 = vmatprep.subr.mxu0 0.0
    %466 = vmatpush1.msra.mxu0 0.0
    %467 = vmatprep.subr.mxu0 0.0
    %468 = vmatpush1.msra.mxu0 0.0
    %469 = vmatprep.subr.mxu0 0.0
    %470 = vmatpush1.msra.mxu0 0.0
    %471 = vmatprep.subr.mxu0 0.0
    %472 = vmatpush1.msra.mxu0 0.0
    %473 = vmatprep.subr.mxu0 0.0
    %474 = vmatpush1.msra.mxu0 0.0
    %475 = vmatprep.subr.mxu0 0.0
    %476 = vmatpush1.msra.mxu0 0.0
    %477 = vmatprep.subr.mxu0 0.0
    %478 = vmatpush1.msra.mxu0 0.0
    %479 = vmatprep.subr.mxu0 0.0
    %480 = vmatpush1.msra.mxu0 0.0
    %481 = vmatprep.subr.mxu0 0.0
    %482 = vmatpush1.msra.mxu0 0.0
    %483 = vmatprep.subr.mxu0 0.0
    %484 = vmatpush1.msra.mxu0 0.0
    %485 = vmatprep.subr.mxu0 0.0
    %486 = vmatpush1.msra.mxu0 0.0
    %487 = vmatprep.subr.mxu0 0.0
    %488 = vmatpush1.msra.mxu0 0.0
    %489 = vmatprep.subr.mxu0 0.0
    %490 = vmatpush1.msra.mxu0 0.0
    %491 = vmatprep.subr.mxu0 0.0
    %492 = vmatpush1.msra.mxu0 0.0
    %493 = vmatprep.subr.mxu0 0.0
    %494 = vmatpush1.msra.mxu0 0.0
    %495 = vmatprep.subr.mxu0 0.0
    %496 = vmatpush1.msra.mxu0 0.0
    %497 = vmatprep.subr.mxu0 0.0
    %498 = vmatpush1.msra.mxu0 0.0
    %499 = vmatprep.subr.mxu0 0.0
    %500 = vmatpush1.msra.mxu0 0.0
    %501 = vmatprep.subr.mxu0 0.0
    %502 = vmatpush1.msra.mxu0 0.0
    %503 = vmatprep.subr.mxu0 0.0
    %504 = vmatpush1.msra.mxu0 0.0
    %505 = vmatprep.subr.mxu0 0.0
    %506 = vmatpush1.msra.mxu0 0.0
    %507 = vmatprep.subr.mxu0 0.0
    %508 = vmatpush1.msra.mxu0 0.0
    %509 = vmatprep.subr.mxu0 0.0
    %510 = vmatpush1.msra.mxu0 0.0
    %511 = vmatprep.subr.mxu0 0.0
    %512 = vmatpush1.msra.mxu0 0.0
    %513 = vmatprep.subr.mxu0 0.0
    %514 = vmatpush1.msra.mxu0 0.0
    %515 = vmatprep.subr.mxu0 0.0
    %516 = vmatpush1.msra.mxu0 0.0
    %517 = vmatprep.subr.mxu0 0.0
    %518 = vmatpush1.msra.mxu0 0.0
    %519 = vmatprep.subr.mxu0 0.0
    %520 = vmatpush1.msra.mxu0 0.0
    %521 = vmatprep.mubr.f32.mxu0 0.0
    %v522 = vand.u32 %v50, 4294901760
    %523 = vmatmul.mubr.f32.gmra.mrb[0].mxu0 %v522
    %v524 = vpop.f32.mrb[0].mxu0
    %v525 = vadd.f32 %v426, %v524
    %v526 = vpop.f32.mrb[0].mxu0
    %v527 = vadd.f32 %v428, %v526
    %528 = vmatprep.mubr.f32.mxu0 0.0
    %v529 = vand.u32 %v53, 4294901760
    %530 = vmatmul.mubr.f32.gmra.mrb[0].mxu0 %v529
    %v531 = vpop.f32.mrb[0].mxu0
    %v532 = vadd.f32 %v435, %v531
    %v533 = vpop.f32.mrb[0].mxu0
    %v534 = vadd.f32 %v437, %v533
    %535 = vdwg.mxu0
    %v536 = vand.u32 %v43, 4294901760
    %537 = vmatprep.subr.mxu0 %v536
    %v538 = vand.u32 %v42, 4294901760
    %539 = vmatpush1.msra.mxu0 %v538
    %v540 = vand.u32 %v45, 4294901760
    %541 = vmatprep.subr.mxu0 %v540
    %v542 = vand.u32 %v44, 4294901760
    %543 = vmatpush1.msra.mxu0 %v542
    %v544 = vand.u32 %v47, 4294901760
    %545 = vmatprep.subr.mxu0 %v544
    %v546 = vand.u32 %v46, 4294901760
    %547 = vmatpush1.msra.mxu0 %v546
    %548 = vmatprep.subr.mxu0 0.0
    %549 = vmatpush1.msra.mxu0 0.0
    %550 = vmatprep.subr.mxu0 0.0
    %551 = vmatpush1.msra.mxu0 0.0
    %552 = vmatprep.subr.mxu0 0.0
    %553 = vmatpush1.msra.mxu0 0.0
    %554 = vmatprep.subr.mxu0 0.0
    %555 = vmatpush1.msra.mxu0 0.0
    %556 = vmatprep.subr.mxu0 0.0
    %557 = vmatpush1.msra.mxu0 0.0
    %558 = vmatprep.subr.mxu0 0.0
    %559 = vmatpush1.msra.mxu0 0.0
    %560 = vmatprep.subr.mxu0 0.0
    %561 = vmatpush1.msra.mxu0 0.0
    %562 = vmatprep.subr.mxu0 0.0
    %563 = vmatpush1.msra.mxu0 0.0
    %564 = vmatprep.subr.mxu0 0.0
    %565 = vmatpush1.msra.mxu0 0.0
    %566 = vmatprep.subr.mxu0 0.0
    %567 = vmatpush1.msra.mxu0 0.0
    %568 = vmatprep.subr.mxu0 0.0
    %569 = vmatpush1.msra.mxu0 0.0
    %570 = vmatprep.subr.mxu0 0.0
    %571 = vmatpush1.msra.mxu0 0.0
    %572 = vmatprep.subr.mxu0 0.0
    %573 = vmatpush1.msra.mxu0 0.0
    %574 = vmatprep.subr.mxu0 0.0
    %575 = vmatpush1.msra.mxu0 0.0
    %576 = vmatprep.subr.mxu0 0.0
    %577 = vmatpush1.msra.mxu0 0.0
    %578 = vmatprep.subr.mxu0 0.0
    %579 = vmatpush1.msra.mxu0 0.0
    %580 = vmatprep.subr.mxu0 0.0
    %581 = vmatpush1.msra.mxu0 0.0
    %582 = vmatprep.subr.mxu0 0.0
    %583 = vmatpush1.msra.mxu0 0.0
    %584 = vmatprep.subr.mxu0 0.0
    %585 = vmatpush1.msra.mxu0 0.0
    %586 = vmatprep.subr.mxu0 0.0
    %587 = vmatpush1.msra.mxu0 0.0
    %588 = vmatprep.subr.mxu0 0.0
    %589 = vmatpush1.msra.mxu0 0.0
    %590 = vmatprep.subr.mxu0 0.0
    %591 = vmatpush1.msra.mxu0 0.0
    %592 = vmatprep.subr.mxu0 0.0
    %593 = vmatpush1.msra.mxu0 0.0
    %594 = vmatprep.subr.mxu0 0.0
    %595 = vmatpush1.msra.mxu0 0.0
    %596 = vmatprep.subr.mxu0 0.0
    %597 = vmatpush1.msra.mxu0 0.0
    %598 = vmatprep.subr.mxu0 0.0
    %599 = vmatpush1.msra.mxu0 0.0
    %600 = vmatprep.subr.mxu0 0.0
    %601 = vmatpush1.msra.mxu0 0.0
    %602 = vmatprep.subr.mxu0 0.0
    %603 = vmatpush1.msra.mxu0 0.0
    %604 = vmatprep.subr.mxu0 0.0
    %605 = vmatpush1.msra.mxu0 0.0
    %606 = vmatprep.mubr.f32.mxu0 0.0
    %v607 = vand.u32 %v50, 4294901760
    %608 = vmatmul.mubr.f32.gmra.mrb[0].mxu0 %v607
    %v609 = vpop.f32.mrb[0].mxu0
    %v610 = vadd.f32 %v525, %v609
    %v611 = vpop.f32.mrb[0].mxu0
    %v612 = vadd.f32 %v527, %v611
    %613 = vmatprep.mubr.f32.mxu0 0.0
    %v614 = vand.u32 %v53, 4294901760
    %615 = vmatmul.mubr.f32.gmra.mrb[0].mxu0 %v614
    %v616 = vpop.f32.mrb[0].mxu0
    %v617 = vadd.f32 %v532, %v616
    %v618 = vpop.f32.mrb[0].mxu0
    %v619 = vadd.f32 %v534, %v618
    %620 = vdwg.mxu0
    %s621 = sadd.s32 0, 6
    %s622 = smul.addr %s621, 8
    %s623 = scalar_lea.vmem [#allocation5], %s622
    %v624 = vld [vmem:[%s623] sm:$0xff]
    %v625 = vld [vmem:[%s623 + $0x8] sm:$0xff]
    %v626 = vld [vmem:[%s623 + $0x10] sm:$0xff]
    %v627 = vld [vmem:[%s623 + $0x18] sm:$0xff]
    %v628 = vld [vmem:[%s623 + $0x20] sm:$0xff]
    %v629 = vld [vmem:[%s623 + $0x28] sm:$0xff]
    %v630 = vand.u32 %v625, 4294901760
    %631 = vmatprep.subr.mxu0 %v630
    %v632 = vand.u32 %v624, 4294901760
    %633 = vmatpush1.msra.mxu0 %v632
    %v634 = vand.u32 %v627, 4294901760
    %635 = vmatprep.subr.mxu0 %v634
    %v636 = vand.u32 %v626, 4294901760
    %637 = vmatpush1.msra.mxu0 %v636
    %v638 = vand.u32 %v629, 4294901760
    %639 = vmatprep.subr.mxu0 %v638
    %v640 = vand.u32 %v628, 4294901760
    %641 = vmatpush1.msra.mxu0 %v640
    %642 = vmatprep.subr.mxu0 0.0
    %643 = vmatpush1.msra.mxu0 0.0
    %644 = vmatprep.subr.mxu0 0.0
    %645 = vmatpush1.msra.mxu0 0.0
    %646 = vmatprep.subr.mxu0 0.0
    %647 = vmatpush1.msra.mxu0 0.0
    %648 = vmatprep.subr.mxu0 0.0
    %649 = vmatpush1.msra.mxu0 0.0
    %650 = vmatprep.subr.mxu0 0.0
    %651 = vmatpush1.msra.mxu0 0.0
    %652 = vmatprep.subr.mxu0 0.0
    %653 = vmatpush1.msra.mxu0 0.0
    %654 = vmatprep.subr.mxu0 0.0
    %655 = vmatpush1.msra.mxu0 0.0
    %656 = vmatprep.subr.mxu0 0.0
    %657 = vmatpush1.msra.mxu0 0.0
    %658 = vmatprep.subr.mxu0 0.0
    %659 = vmatpush1.msra.mxu0 0.0
    %660 = vmatprep.subr.mxu0 0.0
    %661 = vmatpush1.msra.mxu0 0.0
    %662 = vmatprep.subr.mxu0 0.0
    %663 = vmatpush1.msra.mxu0 0.0
    %664 = vmatprep.subr.mxu0 0.0
    %665 = vmatpush1.msra.mxu0 0.0
    %666 = vmatprep.subr.mxu0 0.0
    %667 = vmatpush1.msra.mxu0 0.0
    %668 = vmatprep.subr.mxu0 0.0
    %669 = vmatpush1.msra.mxu0 0.0
    %670 = vmatprep.subr.mxu0 0.0
    %671 = vmatpush1.msra.mxu0 0.0
    %672 = vmatprep.subr.mxu0 0.0
    %673 = vmatpush1.msra.mxu0 0.0
    %674 = vmatprep.subr.mxu0 0.0
    %675 = vmatpush1.msra.mxu0 0.0
    %676 = vmatprep.subr.mxu0 0.0
    %677 = vmatpush1.msra.mxu0 0.0
    %678 = vmatprep.subr.mxu0 0.0
    %679 = vmatpush1.msra.mxu0 0.0
    %680 = vmatprep.subr.mxu0 0.0
    %681 = vmatpush1.msra.mxu0 0.0
    %682 = vmatprep.subr.mxu0 0.0
    %683 = vmatpush1.msra.mxu0 0.0
    %684 = vmatprep.subr.mxu0 0.0
    %685 = vmatpush1.msra.mxu0 0.0
    %686 = vmatprep.subr.mxu0 0.0
    %687 = vmatpush1.msra.mxu0 0.0
    %688 = vmatprep.subr.mxu0 0.0
    %689 = vmatpush1.msra.mxu0 0.0
    %690 = vmatprep.subr.mxu0 0.0
    %691 = vmatpush1.msra.mxu0 0.0
    %692 = vmatprep.subr.mxu0 0.0
    %693 = vmatpush1.msra.mxu0 0.0
    %694 = vmatprep.subr.mxu0 0.0
    %695 = vmatpush1.msra.mxu0 0.0
    %696 = vmatprep.subr.mxu0 0.0
    %697 = vmatpush1.msra.mxu0 0.0
    %698 = vmatprep.subr.mxu0 0.0
    %699 = vmatpush1.msra.mxu0 0.0
    %700 = vmatprep.mubr.f32.mxu0 0.0
    %v701 = vand.u32 %v50, 4294901760
    %v702 = vsub.f32 %v50, %v701
    %v703 = vand.u32 %v702, 4294901760
    %v704 = vsub.f32 %v702, %v703
    %v705 = vand.u32 %v704, 4294901760
    %706 = vmatmul.mubr.f32.gmra.mrb[0].mxu0 %v705
    %v707 = vpop.f32.mrb[0].mxu0
    %v708 = vadd.f32 0.0, %v707
    %v709 = vpop.f32.mrb[0].mxu0
    %v710 = vadd.f32 0.0, %v709
    %711 = vmatprep.mubr.f32.mxu0 0.0
    %v712 = vand.u32 %v53, 4294901760
    %v713 = vsub.f32 %v53, %v712
    %v714 = vand.u32 %v713, 4294901760
    %v715 = vsub.f32 %v713, %v714
    %v716 = vand.u32 %v715, 4294901760
    %717 = vmatmul.mubr.f32.gmra.mrb[0].mxu0 %v716
    %v718 = vpop.f32.mrb[0].mxu0
    %v719 = vadd.f32 0.0, %v718
    %v720 = vpop.f32.mrb[0].mxu0
    %v721 = vadd.f32 0.0, %v720
    %722 = vdwg.mxu0
    %v723 = vand.u32 %v625, 4294901760
    %v724 = vsub.f32 %v625, %v723
    %v725 = vand.u32 %v724, 4294901760
    %v726 = vsub.f32 %v724, %v725
    %v727 = vand.u32 %v726, 4294901760
    %728 = vmatprep.subr.mxu0 %v727
    %v729 = vand.u32 %v624, 4294901760
    %v730 = vsub.f32 %v624, %v729
    %v731 = vand.u32 %v730, 4294901760
    %v732 = vsub.f32 %v730, %v731
    %v733 = vand.u32 %v732, 4294901760
    %734 = vmatpush1.msra.mxu0 %v733
    %v735 = vand.u32 %v627, 4294901760
    %v736 = vsub.f32 %v627, %v735
    %v737 = vand.u32 %v736, 4294901760
    %v738 = vsub.f32 %v736, %v737
    %v739 = vand.u32 %v738, 4294901760
    %740 = vmatprep.subr.mxu0 %v739
    %v741 = vand.u32 %v626, 4294901760
    %v742 = vsub.f32 %v626, %v741
    %v743 = vand.u32 %v742, 4294901760
    %v744 = vsub.f32 %v742, %v743
    %v745 = vand.u32 %v744, 4294901760
    %746 = vmatpush1.msra.mxu0 %v745
    %v747 = vand.u32 %v629, 4294901760
    %v748 = vsub.f32 %v629, %v747
    %v749 = vand.u32 %v748, 4294901760
    %v750 = vsub.f32 %v748, %v749
    %v751 = vand.u32 %v750, 4294901760
    %752 = vmatprep.subr.mxu0 %v751
    %v753 = vand.u32 %v628, 4294901760
    %v754 = vsub.f32 %v628, %v753
    %v755 = vand.u32 %v754, 4294901760
    %v756 = vsub.f32 %v754, %v755
    %v757 = vand.u32 %v756, 4294901760
    %758 = vmatpush1.msra.mxu0 %v757
    %759 = vmatprep.subr.mxu0 0.0
    %760 = vmatpush1.msra.mxu0 0.0
    %761 = vmatprep.subr.mxu0 0.0
    %762 = vmatpush1.msra.mxu0 0.0
    %763 = vmatprep.subr.mxu0 0.0
    %764 = vmatpush1.msra.mxu0 0.0
    %765 = vmatprep.subr.mxu0 0.0
    %766 = vmatpush1.msra.mxu0 0.0
    %767 = vmatprep.subr.mxu0 0.0
    %768 = vmatpush1.msra.mxu0 0.0
    %769 = vmatprep.subr.mxu0 0.0
    %770 = vmatpush1.msra.mxu0 0.0
    %771 = vmatprep.subr.mxu0 0.0
    %772 = vmatpush1.msra.mxu0 0.0
    %773 = vmatprep.subr.mxu0 0.0
    %774 = vmatpush1.msra.mxu0 0.0
    %775 = vmatprep.subr.mxu0 0.0
    %776 = vmatpush1.msra.mxu0 0.0
    %777 = vmatprep.subr.mxu0 0.0
    %778 = vmatpush1.msra.mxu0 0.0
    %779 = vmatprep.subr.mxu0 0.0
    %780 = vmatpush1.msra.mxu0 0.0
    %781 = vmatprep.subr.mxu0 0.0
    %782 = vmatpush1.msra.mxu0 0.0
    %783 = vmatprep.subr.mxu0 0.0
    %784 = vmatpush1.msra.mxu0 0.0
    %785 = vmatprep.subr.mxu0 0.0
    %786 = vmatpush1.msra.mxu0 0.0
    %787 = vmatprep.subr.mxu0 0.0
    %788 = vmatpush1.msra.mxu0 0.0
    %789 = vmatprep.subr.mxu0 0.0
    %790 = vmatpush1.msra.mxu0 0.0
    %791 = vmatprep.subr.mxu0 0.0
    %792 = vmatpush1.msra.mxu0 0.0
    %793 = vmatprep.subr.mxu0 0.0
    %794 = vmatpush1.msra.mxu0 0.0
    %795 = vmatprep.subr.mxu0 0.0
    %796 = vmatpush1.msra.mxu0 0.0
    %797 = vmatprep.subr.mxu0 0.0
    %798 = vmatpush1.msra.mxu0 0.0
    %799 = vmatprep.subr.mxu0 0.0
    %800 = vmatpush1.msra.mxu0 0.0
    %801 = vmatprep.subr.mxu0 0.0
    %802 = vmatpush1.msra.mxu0 0.0
    %803 = vmatprep.subr.mxu0 0.0
    %804 = vmatpush1.msra.mxu0 0.0
    %805 = vmatprep.subr.mxu0 0.0
    %806 = vmatpush1.msra.mxu0 0.0
    %807 = vmatprep.subr.mxu0 0.0
    %808 = vmatpush1.msra.mxu0 0.0
    %809 = vmatprep.subr.mxu0 0.0
    %810 = vmatpush1.msra.mxu0 0.0
    %811 = vmatprep.subr.mxu0 0.0
    %812 = vmatpush1.msra.mxu0 0.0
    %813 = vmatprep.subr.mxu0 0.0
    %814 = vmatpush1.msra.mxu0 0.0
    %815 = vmatprep.subr.mxu0 0.0
    %816 = vmatpush1.msra.mxu0 0.0
    %817 = vmatprep.mubr.f32.mxu0 0.0
    %v818 = vand.u32 %v50, 4294901760
    %819 = vmatmul.mubr.f32.gmra.mrb[0].mxu0 %v818
    %v820 = vpop.f32.mrb[0].mxu0
    %v821 = vadd.f32 %v708, %v820
    %v822 = vpop.f32.mrb[0].mxu0
    %v823 = vadd.f32 %v710, %v822
    %824 = vmatprep.mubr.f32.mxu0 0.0
    %v825 = vand.u32 %v53, 4294901760
    %826 = vmatmul.mubr.f32.gmra.mrb[0].mxu0 %v825
    %v827 = vpop.f32.mrb[0].mxu0
    %v828 = vadd.f32 %v719, %v827
    %v829 = vpop.f32.mrb[0].mxu0
    %v830 = vadd.f32 %v721, %v829
    %831 = vdwg.mxu0
    %v832 = vand.u32 %v625, 4294901760
    %v833 = vsub.f32 %v625, %v832
    %834 = vmatprep.subr.mxu0 %v833
    %v835 = vand.u32 %v624, 4294901760
    %v836 = vsub.f32 %v624, %v835
    %837 = vmatpush1.msra.mxu0 %v836
    %v838 = vand.u32 %v627, 4294901760
    %v839 = vsub.f32 %v627, %v838
    %840 = vmatprep.subr.mxu0 %v839
    %v841 = vand.u32 %v626, 4294901760
    %v842 = vsub.f32 %v626, %v841
    %843 = vmatpush1.msra.mxu0 %v842
    %v844 = vand.u32 %v629, 4294901760
    %v845 = vsub.f32 %v629, %v844
    %846 = vmatprep.subr.mxu0 %v845
    %v847 = vand.u32 %v628, 4294901760
    %v848 = vsub.f32 %v628, %v847
    %849 = vmatpush1.msra.mxu0 %v848
    %850 = vmatprep.subr.mxu0 0.0
    %851 = vmatpush1.msra.mxu0 0.0
    %852 = vmatprep.subr.mxu0 0.0
    %853 = vmatpush1.msra.mxu0 0.0
    %854 = vmatprep.subr.mxu0 0.0
    %855 = vmatpush1.msra.mxu0 0.0
    %856 = vmatprep.subr.mxu0 0.0
    %857 = vmatpush1.msra.mxu0 0.0
    %858 = vmatprep.subr.mxu0 0.0
    %859 = vmatpush1.msra.mxu0 0.0
    %860 = vmatprep.subr.mxu0 0.0
    %861 = vmatpush1.msra.mxu0 0.0
    %862 = vmatprep.subr.mxu0 0.0
    %863 = vmatpush1.msra.mxu0 0.0
    %864 = vmatprep.subr.mxu0 0.0
    %865 = vmatpush1.msra.mxu0 0.0
    %866 = vmatprep.subr.mxu0 0.0
    %867 = vmatpush1.msra.mxu0 0.0
    %868 = vmatprep.subr.mxu0 0.0
    %869 = vmatpush1.msra.mxu0 0.0
    %870 = vmatprep.subr.mxu0 0.0
    %871 = vmatpush1.msra.mxu0 0.0
    %872 = vmatprep.subr.mxu0 0.0
    %873 = vmatpush1.msra.mxu0 0.0
    %874 = vmatprep.subr.mxu0 0.0
    %875 = vmatpush1.msra.mxu0 0.0
    %876 = vmatprep.subr.mxu0 0.0
    %877 = vmatpush1.msra.mxu0 0.0
    %878 = vmatprep.subr.mxu0 0.0
    %879 = vmatpush1.msra.mxu0 0.0
    %880 = vmatprep.subr.mxu0 0.0
    %881 = vmatpush1.msra.mxu0 0.0
    %882 = vmatprep.subr.mxu0 0.0
    %883 = vmatpush1.msra.mxu0 0.0
    %884 = vmatprep.subr.mxu0 0.0
    %885 = vmatpush1.msra.mxu0 0.0
    %886 = vmatprep.subr.mxu0 0.0
    %887 = vmatpush1.msra.mxu0 0.0
    %888 = vmatprep.subr.mxu0 0.0
    %889 = vmatpush1.msra.mxu0 0.0
    %890 = vmatprep.subr.mxu0 0.0
    %891 = vmatpush1.msra.mxu0 0.0
    %892 = vmatprep.subr.mxu0 0.0
    %893 = vmatpush1.msra.mxu0 0.0
    %894 = vmatprep.subr.mxu0 0.0
    %895 = vmatpush1.msra.mxu0 0.0
    %896 = vmatprep.subr.mxu0 0.0
    %897 = vmatpush1.msra.mxu0 0.0
    %898 = vmatprep.subr.mxu0 0.0
    %899 = vmatpush1.msra.mxu0 0.0
    %900 = vmatprep.subr.mxu0 0.0
    %901 = vmatpush1.msra.mxu0 0.0
    %902 = vmatprep.subr.mxu0 0.0
    %903 = vmatpush1.msra.mxu0 0.0
    %904 = vmatprep.subr.mxu0 0.0
    %905 = vmatpush1.msra.mxu0 0.0
    %906 = vmatprep.subr.mxu0 0.0
    %907 = vmatpush1.msra.mxu0 0.0
    %908 = vmatprep.mubr.f32.mxu0 0.0
    %v909 = vand.u32 %v50, 4294901760
    %v910 = vsub.f32 %v50, %v909
    %911 = vmatmul.mubr.f32.gmra.mrb[0].mxu0 %v910
    %v912 = vpop.f32.mrb[0].mxu0
    %v913 = vadd.f32 %v821, %v912
    %v914 = vpop.f32.mrb[0].mxu0
    %v915 = vadd.f32 %v823, %v914
    %916 = vmatprep.mubr.f32.mxu0 0.0
    %v917 = vand.u32 %v53, 4294901760
    %v918 = vsub.f32 %v53, %v917
    %919 = vmatmul.mubr.f32.gmra.mrb[0].mxu0 %v918
    %v920 = vpop.f32.mrb[0].mxu0
    %v921 = vadd.f32 %v828, %v920
    %v922 = vpop.f32.mrb[0].mxu0
    %v923 = vadd.f32 %v830, %v922
    %924 = vdwg.mxu0
    %v925 = vand.u32 %v625, 4294901760
    %926 = vmatprep.subr.mxu0 %v925
    %v927 = vand.u32 %v624, 4294901760
    %928 = vmatpush1.msra.mxu0 %v927
    %v929 = vand.u32 %v627, 4294901760
    %930 = vmatprep.subr.mxu0 %v929
    %v931 = vand.u32 %v626, 4294901760
    %932 = vmatpush1.msra.mxu0 %v931
    %v933 = vand.u32 %v629, 4294901760
    %934 = vmatprep.subr.mxu0 %v933
    %v935 = vand.u32 %v628, 4294901760
    %936 = vmatpush1.msra.mxu0 %v935
    %937 = vmatprep.subr.mxu0 0.0
    %938 = vmatpush1.msra.mxu0 0.0
    %939 = vmatprep.subr.mxu0 0.0
    %940 = vmatpush1.msra.mxu0 0.0
    %941 = vmatprep.subr.mxu0 0.0
    %942 = vmatpush1.msra.mxu0 0.0
    %943 = vmatprep.subr.mxu0 0.0
    %944 = vmatpush1.msra.mxu0 0.0
    %945 = vmatprep.subr.mxu0 0.0
    %946 = vmatpush1.msra.mxu0 0.0
    %947 = vmatprep.subr.mxu0 0.0
    %948 = vmatpush1.msra.mxu0 0.0
    %949 = vmatprep.subr.mxu0 0.0
    %950 = vmatpush1.msra.mxu0 0.0
    %951 = vmatprep.subr.mxu0 0.0
    %952 = vmatpush1.msra.mxu0 0.0
    %953 = vmatprep.subr.mxu0 0.0
    %954 = vmatpush1.msra.mxu0 0.0
    %955 = vmatprep.subr.mxu0 0.0
    %956 = vmatpush1.msra.mxu0 0.0
    %957 = vmatprep.subr.mxu0 0.0
    %958 = vmatpush1.msra.mxu0 0.0
    %959 = vmatprep.subr.mxu0 0.0
    %960 = vmatpush1.msra.mxu0 0.0
    %961 = vmatprep.subr.mxu0 0.0
    %962 = vmatpush1.msra.mxu0 0.0
    %963 = vmatprep.subr.mxu0 0.0
    %964 = vmatpush1.msra.mxu0 0.0
    %965 = vmatprep.subr.mxu0 0.0
    %966 = vmatpush1.msra.mxu0 0.0
    %967 = vmatprep.subr.mxu0 0.0
    %968 = vmatpush1.msra.mxu0 0.0
    %969 = vmatprep.subr.mxu0 0.0
    %970 = vmatpush1.msra.mxu0 0.0
    %971 = vmatprep.subr.mxu0 0.0
    %972 = vmatpush1.msra.mxu0 0.0
    %973 = vmatprep.subr.mxu0 0.0
    %974 = vmatpush1.msra.mxu0 0.0
    %975 = vmatprep.subr.mxu0 0.0
    %976 = vmatpush1.msra.mxu0 0.0
    %977 = vmatprep.subr.mxu0 0.0
    %978 = vmatpush1.msra.mxu0 0.0
    %979 = vmatprep.subr.mxu0 0.0
    %980 = vmatpush1.msra.mxu0 0.0
    %981 = vmatprep.subr.mxu0 0.0
    %982 = vmatpush1.msra.mxu0 0.0
    %983 = vmatprep.subr.mxu0 0.0
    %984 = vmatpush1.msra.mxu0 0.0
    %985 = vmatprep.subr.mxu0 0.0
    %986 = vmatpush1.msra.mxu0 0.0
    %987 = vmatprep.subr.mxu0 0.0
    %988 = vmatpush1.msra.mxu0 0.0
    %989 = vmatprep.subr.mxu0 0.0
    %990 = vmatpush1.msra.mxu0 0.0
    %991 = vmatprep.subr.mxu0 0.0
    %992 = vmatpush1.msra.mxu0 0.0
    %993 = vmatprep.subr.mxu0 0.0
    %994 = vmatpush1.msra.mxu0 0.0
    %995 = vmatprep.mubr.f32.mxu0 0.0
    %v996 = vand.u32 %v50, 4294901760
    %v997 = vsub.f32 %v50, %v996
    %v998 = vand.u32 %v997, 4294901760
    %999 = vmatmul.mubr.f32.gmra.mrb[0].mxu0 %v998
    %v1000 = vpop.f32.mrb[0].mxu0
    %v1001 = vadd.f32 %v913, %v1000
    %v1002 = vpop.f32.mrb[0].mxu0
    %v1003 = vadd.f32 %v915, %v1002
    %1004 = vmatprep.mubr.f32.mxu0 0.0
    %v1005 = vand.u32 %v53, 4294901760
    %v1006 = vsub.f32 %v53, %v1005
    %v1007 = vand.u32 %v1006, 4294901760
    %1008 = vmatmul.mubr.f32.gmra.mrb[0].mxu0 %v1007
    %v1009 = vpop.f32.mrb[0].mxu0
    %v1010 = vadd.f32 %v921, %v1009
    %v1011 = vpop.f32.mrb[0].mxu0
    %v1012 = vadd.f32 %v923, %v1011
    %1013 = vdwg.mxu0
    %v1014 = vand.u32 %v625, 4294901760
    %v1015 = vsub.f32 %v625, %v1014
    %v1016 = vand.u32 %v1015, 4294901760
    %1017 = vmatprep.subr.mxu0 %v1016
    %v1018 = vand.u32 %v624, 4294901760
    %v1019 = vsub.f32 %v624, %v1018
    %v1020 = vand.u32 %v1019, 4294901760
    %1021 = vmatpush1.msra.mxu0 %v1020
    %v1022 = vand.u32 %v627, 4294901760
    %v1023 = vsub.f32 %v627, %v1022
    %v1024 = vand.u32 %v1023, 4294901760
    %1025 = vmatprep.subr.mxu0 %v1024
    %v1026 = vand.u32 %v626, 4294901760
    %v1027 = vsub.f32 %v626, %v1026
    %v1028 = vand.u32 %v1027, 4294901760
    %1029 = vmatpush1.msra.mxu0 %v1028
    %v1030 = vand.u32 %v629, 4294901760
    %v1031 = vsub.f32 %v629, %v1030
    %v1032 = vand.u32 %v1031, 4294901760
    %1033 = vmatprep.subr.mxu0 %v1032
    %v1034 = vand.u32 %v628, 4294901760
    %v1035 = vsub.f32 %v628, %v1034
    %v1036 = vand.u32 %v1035, 4294901760
    %1037 = vmatpush1.msra.mxu0 %v1036
    %1038 = vmatprep.subr.mxu0 0.0
    %1039 = vmatpush1.msra.mxu0 0.0
    %1040 = vmatprep.subr.mxu0 0.0
    %1041 = vmatpush1.msra.mxu0 0.0
    %1042 = vmatprep.subr.mxu0 0.0
    %1043 = vmatpush1.msra.mxu0 0.0
    %1044 = vmatprep.subr.mxu0 0.0
    %1045 = vmatpush1.msra.mxu0 0.0
    %1046 = vmatprep.subr.mxu0 0.0
    %1047 = vmatpush1.msra.mxu0 0.0
    %1048 = vmatprep.subr.mxu0 0.0
    %1049 = vmatpush1.msra.mxu0 0.0
    %1050 = vmatprep.subr.mxu0 0.0
    %1051 = vmatpush1.msra.mxu0 0.0
    %1052 = vmatprep.subr.mxu0 0.0
    %1053 = vmatpush1.msra.mxu0 0.0
    %1054 = vmatprep.subr.mxu0 0.0
    %1055 = vmatpush1.msra.mxu0 0.0
    %1056 = vmatprep.subr.mxu0 0.0
    %1057 = vmatpush1.msra.mxu0 0.0
    %1058 = vmatprep.subr.mxu0 0.0
    %1059 = vmatpush1.msra.mxu0 0.0
    %1060 = vmatprep.subr.mxu0 0.0
    %1061 = vmatpush1.msra.mxu0 0.0
    %1062 = vmatprep.subr.mxu0 0.0
    %1063 = vmatpush1.msra.mxu0 0.0
    %1064 = vmatprep.subr.mxu0 0.0
    %1065 = vmatpush1.msra.mxu0 0.0
    %1066 = vmatprep.subr.mxu0 0.0
    %1067 = vmatpush1.msra.mxu0 0.0
    %1068 = vmatprep.subr.mxu0 0.0
    %1069 = vmatpush1.msra.mxu0 0.0
    %1070 = vmatprep.subr.mxu0 0.0
    %1071 = vmatpush1.msra.mxu0 0.0
    %1072 = vmatprep.subr.mxu0 0.0
    %1073 = vmatpush1.msra.mxu0 0.0
    %1074 = vmatprep.subr.mxu0 0.0
    %1075 = vmatpush1.msra.mxu0 0.0
    %1076 = vmatprep.subr.mxu0 0.0
    %1077 = vmatpush1.msra.mxu0 0.0
    %1078 = vmatprep.subr.mxu0 0.0
    %1079 = vmatpush1.msra.mxu0 0.0
    %1080 = vmatprep.subr.mxu0 0.0
    %1081 = vmatpush1.msra.mxu0 0.0
    %1082 = vmatprep.subr.mxu0 0.0
    %1083 = vmatpush1.msra.mxu0 0.0
    %1084 = vmatprep.subr.mxu0 0.0
    %1085 = vmatpush1.msra.mxu0 0.0
    %1086 = vmatprep.subr.mxu0 0.0
    %1087 = vmatpush1.msra.mxu0 0.0
    %1088 = vmatprep.subr.mxu0 0.0
    %1089 = vmatpush1.msra.mxu0 0.0
    %1090 = vmatprep.subr.mxu0 0.0
    %1091 = vmatpush1.msra.mxu0 0.0
    %1092 = vmatprep.subr.mxu0 0.0
    %1093 = vmatpush1.msra.mxu0 0.0
    %1094 = vmatprep.subr.mxu0 0.0
    %1095 = vmatpush1.msra.mxu0 0.0
    %1096 = vmatprep.mubr.f32.mxu0 0.0
    %v1097 = vand.u32 %v50, 4294901760
    %1098 = vmatmul.mubr.f32.gmra.mrb[0].mxu0 %v1097
    %v1099 = vpop.f32.mrb[0].mxu0
    %v1100 = vadd.f32 %v1001, %v1099
    %v1101 = vpop.f32.mrb[0].mxu0
    %v1102 = vadd.f32 %v1003, %v1101
    %1103 = vmatprep.mubr.f32.mxu0 0.0
    %v1104 = vand.u32 %v53, 4294901760
    %1105 = vmatmul.mubr.f32.gmra.mrb[0].mxu0 %v1104
    %v1106 = vpop.f32.mrb[0].mxu0
    %v1107 = vadd.f32 %v1010, %v1106
    %v1108 = vpop.f32.mrb[0].mxu0
    %v1109 = vadd.f32 %v1012, %v1108
    %1110 = vdwg.mxu0
    %v1111 = vand.u32 %v625, 4294901760
    %1112 = vmatprep.subr.mxu0 %v1111
    %v1113 = vand.u32 %v624, 4294901760
    %1114 = vmatpush1.msra.mxu0 %v1113
    %v1115 = vand.u32 %v627, 4294901760
    %1116 = vmatprep.subr.mxu0 %v1115
    %v1117 = vand.u32 %v626, 4294901760
    %1118 = vmatpush1.msra.mxu0 %v1117
    %v1119 = vand.u32 %v629, 4294901760
    %1120 = vmatprep.subr.mxu0 %v1119
    %v1121 = vand.u32 %v628, 4294901760
    %1122 = vmatpush1.msra.mxu0 %v1121
    %1123 = vmatprep.subr.mxu0 0.0
    %1124 = vmatpush1.msra.mxu0 0.0
    %1125 = vmatprep.subr.mxu0 0.0
    %1126 = vmatpush1.msra.mxu0 0.0
    %1127 = vmatprep.subr.mxu0 0.0
    %1128 = vmatpush1.msra.mxu0 0.0
    %1129 = vmatprep.subr.mxu0 0.0
    %1130 = vmatpush1.msra.mxu0 0.0
    %1131 = vmatprep.subr.mxu0 0.0
    %1132 = vmatpush1.msra.mxu0 0.0
    %1133 = vmatprep.subr.mxu0 0.0
    %1134 = vmatpush1.msra.mxu0 0.0
    %1135 = vmatprep.subr.mxu0 0.0
    %1136 = vmatpush1.msra.mxu0 0.0
    %1137 = vmatprep.subr.mxu0 0.0
    %1138 = vmatpush1.msra.mxu0 0.0
    %1139 = vmatprep.subr.mxu0 0.0
    %1140 = vmatpush1.msra.mxu0 0.0
    %1141 = vmatprep.subr.mxu0 0.0
    %1142 = vmatpush1.msra.mxu0 0.0
    %1143 = vmatprep.subr.mxu0 0.0
    %1144 = vmatpush1.msra.mxu0 0.0
    %1145 = vmatprep.subr.mxu0 0.0
    %1146 = vmatpush1.msra.mxu0 0.0
    %1147 = vmatprep.subr.mxu0 0.0
    %1148 = vmatpush1.msra.mxu0 0.0
    %1149 = vmatprep.subr.mxu0 0.0
    %1150 = vmatpush1.msra.mxu0 0.0
    %1151 = vmatprep.subr.mxu0 0.0
    %1152 = vmatpush1.msra.mxu0 0.0
    %1153 = vmatprep.subr.mxu0 0.0
    %1154 = vmatpush1.msra.mxu0 0.0
    %1155 = vmatprep.subr.mxu0 0.0
    %1156 = vmatpush1.msra.mxu0 0.0
    %1157 = vmatprep.subr.mxu0 0.0
    %1158 = vmatpush1.msra.mxu0 0.0
    %1159 = vmatprep.subr.mxu0 0.0
    %1160 = vmatpush1.msra.mxu0 0.0
    %1161 = vmatprep.subr.mxu0 0.0
    %1162 = vmatpush1.msra.mxu0 0.0
    %1163 = vmatprep.subr.mxu0 0.0
    %1164 = vmatpush1.msra.mxu0 0.0
    %1165 = vmatprep.subr.mxu0 0.0
    %1166 = vmatpush1.msra.mxu0 0.0
    %1167 = vmatprep.subr.mxu0 0.0
    %1168 = vmatpush1.msra.mxu0 0.0
    %1169 = vmatprep.subr.mxu0 0.0
    %1170 = vmatpush1.msra.mxu0 0.0
    %1171 = vmatprep.subr.mxu0 0.0
    %1172 = vmatpush1.msra.mxu0 0.0
    %1173 = vmatprep.subr.mxu0 0.0
    %1174 = vmatpush1.msra.mxu0 0.0
    %1175 = vmatprep.subr.mxu0 0.0
    %1176 = vmatpush1.msra.mxu0 0.0
    %1177 = vmatprep.subr.mxu0 0.0
    %1178 = vmatpush1.msra.mxu0 0.0
    %1179 = vmatprep.subr.mxu0 0.0
    %1180 = vmatpush1.msra.mxu0 0.0
    %1181 = vmatprep.mubr.f32.mxu0 0.0
    %v1182 = vand.u32 %v50, 4294901760
    %1183 = vmatmul.mubr.f32.gmra.mrb[0].mxu0 %v1182
    %v1184 = vpop.f32.mrb[0].mxu0
    %v1185 = vadd.f32 %v1100, %v1184
    %v1186 = vpop.f32.mrb[0].mxu0
    %v1187 = vadd.f32 %v1102, %v1186
    %1188 = vmatprep.mubr.f32.mxu0 0.0
    %v1189 = vand.u32 %v53, 4294901760
    %1190 = vmatmul.mubr.f32.gmra.mrb[0].mxu0 %v1189
    %v1191 = vpop.f32.mrb[0].mxu0
    %v1192 = vadd.f32 %v1107, %v1191
    %v1193 = vpop.f32.mrb[0].mxu0
    %v1194 = vadd.f32 %v1109, %v1193
    %1195 = vdwg.mxu0
    %s1196 = sadd.s32 0, 12
    %s1197 = smul.addr %s1196, 8
    %s1198 = scalar_lea.vmem [#allocation5], %s1197
    %v1199 = vld [vmem:[%s1198] sm:$0xff]
    %v1200 = vld [vmem:[%s1198 + $0x8] sm:$0xff]
    %v1201 = vld [vmem:[%s1198 + $0x10] sm:$0xff]
    %v1202 = vld [vmem:[%s1198 + $0x18] sm:$0xff]
    %v1203 = vld [vmem:[%s1198 + $0x20] sm:$0xff]
    %v1204 = vld [vmem:[%s1198 + $0x28] sm:$0xff]
    %v1205 = vand.u32 %v1200, 4294901760
    %1206 = vmatprep.subr.mxu0 %v1205
    %v1207 = vand.u32 %v1199, 4294901760
    %1208 = vmatpush1.msra.mxu0 %v1207
    %v1209 = vand.u32 %v1202, 4294901760
    %1210 = vmatprep.subr.mxu0 %v1209
    %v1211 = vand.u32 %v1201, 4294901760
    %1212 = vmatpush1.msra.mxu0 %v1211
    %v1213 = vand.u32 %v1204, 4294901760
    %1214 = vmatprep.subr.mxu0 %v1213
    %v1215 = vand.u32 %v1203, 4294901760
    %1216 = vmatpush1.msra.mxu0 %v1215
    %1217 = vmatprep.subr.mxu0 0.0
    %1218 = vmatpush1.msra.mxu0 0.0
    %1219 = vmatprep.subr.mxu0 0.0
    %1220 = vmatpush1.msra.mxu0 0.0
    %1221 = vmatprep.subr.mxu0 0.0
    %1222 = vmatpush1.msra.mxu0 0.0
    %1223 = vmatprep.subr.mxu0 0.0
    %1224 = vmatpush1.msra.mxu0 0.0
    %1225 = vmatprep.subr.mxu0 0.0
    %1226 = vmatpush1.msra.mxu0 0.0
    %1227 = vmatprep.subr.mxu0 0.0
    %1228 = vmatpush1.msra.mxu0 0.0
    %1229 = vmatprep.subr.mxu0 0.0
    %1230 = vmatpush1.msra.mxu0 0.0
    %1231 = vmatprep.subr.mxu0 0.0
    %1232 = vmatpush1.msra.mxu0 0.0
    %1233 = vmatprep.subr.mxu0 0.0
    %1234 = vmatpush1.msra.mxu0 0.0
    %1235 = vmatprep.subr.mxu0 0.0
    %1236 = vmatpush1.msra.mxu0 0.0
    %1237 = vmatprep.subr.mxu0 0.0
    %1238 = vmatpush1.msra.mxu0 0.0
    %1239 = vmatprep.subr.mxu0 0.0
    %1240 = vmatpush1.msra.mxu0 0.0
    %1241 = vmatprep.subr.mxu0 0.0
    %1242 = vmatpush1.msra.mxu0 0.0
    %1243 = vmatprep.subr.mxu0 0.0
    %1244 = vmatpush1.msra.mxu0 0.0
    %1245 = vmatprep.subr.mxu0 0.0
    %1246 = vmatpush1.msra.mxu0 0.0
    %1247 = vmatprep.subr.mxu0 0.0
    %1248 = vmatpush1.msra.mxu0 0.0
    %1249 = vmatprep.subr.mxu0 0.0
    %1250 = vmatpush1.msra.mxu0 0.0
    %1251 = vmatprep.subr.mxu0 0.0
    %1252 = vmatpush1.msra.mxu0 0.0
    %1253 = vmatprep.subr.mxu0 0.0
    %1254 = vmatpush1.msra.mxu0 0.0
    %1255 = vmatprep.subr.mxu0 0.0
    %1256 = vmatpush1.msra.mxu0 0.0
    %1257 = vmatprep.subr.mxu0 0.0
    %1258 = vmatpush1.msra.mxu0 0.0
    %1259 = vmatprep.subr.mxu0 0.0
    %1260 = vmatpush1.msra.mxu0 0.0
    %1261 = vmatprep.subr.mxu0 0.0
    %1262 = vmatpush1.msra.mxu0 0.0
    %1263 = vmatprep.subr.mxu0 0.0
    %1264 = vmatpush1.msra.mxu0 0.0
    %1265 = vmatprep.subr.mxu0 0.0
    %1266 = vmatpush1.msra.mxu0 0.0
    %1267 = vmatprep.subr.mxu0 0.0
    %1268 = vmatpush1.msra.mxu0 0.0
    %1269 = vmatprep.subr.mxu0 0.0
    %1270 = vmatpush1.msra.mxu0 0.0
    %1271 = vmatprep.subr.mxu0 0.0
    %1272 = vmatpush1.msra.mxu0 0.0
    %1273 = vmatprep.subr.mxu0 0.0
    %1274 = vmatpush1.msra.mxu0 0.0
    %1275 = vmatprep.mubr.f32.mxu0 0.0
    %v1276 = vand.u32 %v50, 4294901760
    %v1277 = vsub.f32 %v50, %v1276
    %v1278 = vand.u32 %v1277, 4294901760
    %v1279 = vsub.f32 %v1277, %v1278
    %v1280 = vand.u32 %v1279, 4294901760
    %1281 = vmatmul.mubr.f32.gmra.mrb[0].mxu0 %v1280
    %v1282 = vpop.f32.mrb[0].mxu0
    %v1283 = vadd.f32 0.0, %v1282
    %v1284 = vpop.f32.mrb[0].mxu0
    %v1285 = vadd.f32 0.0, %v1284
    %1286 = vmatprep.mubr.f32.mxu0 0.0
    %v1287 = vand.u32 %v53, 4294901760
    %v1288 = vsub.f32 %v53, %v1287
    %v1289 = vand.u32 %v1288, 4294901760
    %v1290 = vsub.f32 %v1288, %v1289
    %v1291 = vand.u32 %v1290, 4294901760
    %1292 = vmatmul.mubr.f32.gmra.mrb[0].mxu0 %v1291
    %v1293 = vpop.f32.mrb[0].mxu0
    %v1294 = vadd.f32 0.0, %v1293
    %v1295 = vpop.f32.mrb[0].mxu0
    %v1296 = vadd.f32 0.0, %v1295
    %1297 = vdwg.mxu0
    %v1298 = vand.u32 %v1200, 4294901760
    %v1299 = vsub.f32 %v1200, %v1298
    %v1300 = vand.u32 %v1299, 4294901760
    %v1301 = vsub.f32 %v1299, %v1300
    %v1302 = vand.u32 %v1301, 4294901760
    %1303 = vmatprep.subr.mxu0 %v1302
    %v1304 = vand.u32 %v1199, 4294901760
    %v1305 = vsub.f32 %v1199, %v1304
    %v1306 = vand.u32 %v1305, 4294901760
    %v1307 = vsub.f32 %v1305, %v1306
    %v1308 = vand.u32 %v1307, 4294901760
    %1309 = vmatpush1.msra.mxu0 %v1308
    %v1310 = vand.u32 %v1202, 4294901760
    %v1311 = vsub.f32 %v1202, %v1310
    %v1312 = vand.u32 %v1311, 4294901760
    %v1313 = vsub.f32 %v1311, %v1312
    %v1314 = vand.u32 %v1313, 4294901760
    %1315 = vmatprep.subr.mxu0 %v1314
    %v1316 = vand.u32 %v1201, 4294901760
    %v1317 = vsub.f32 %v1201, %v1316
    %v1318 = vand.u32 %v1317, 4294901760
    %v1319 = vsub.f32 %v1317, %v1318
    %v1320 = vand.u32 %v1319, 4294901760
    %1321 = vmatpush1.msra.mxu0 %v1320
    %v1322 = vand.u32 %v1204, 4294901760
    %v1323 = vsub.f32 %v1204, %v1322
    %v1324 = vand.u32 %v1323, 4294901760
    %v1325 = vsub.f32 %v1323, %v1324
    %v1326 = vand.u32 %v1325, 4294901760
    %1327 = vmatprep.subr.mxu0 %v1326
    %v1328 = vand.u32 %v1203, 4294901760
    %v1329 = vsub.f32 %v1203, %v1328
    %v1330 = vand.u32 %v1329, 4294901760
    %v1331 = vsub.f32 %v1329, %v1330
    %v1332 = vand.u32 %v1331, 4294901760
    %1333 = vmatpush1.msra.mxu0 %v1332
    %1334 = vmatprep.subr.mxu0 0.0
    %1335 = vmatpush1.msra.mxu0 0.0
    %1336 = vmatprep.subr.mxu0 0.0
    %1337 = vmatpush1.msra.mxu0 0.0
    %1338 = vmatprep.subr.mxu0 0.0
    %1339 = vmatpush1.msra.mxu0 0.0
    %1340 = vmatprep.subr.mxu0 0.0
    %1341 = vmatpush1.msra.mxu0 0.0
    %1342 = vmatprep.subr.mxu0 0.0
    %1343 = vmatpush1.msra.mxu0 0.0
    %1344 = vmatprep.subr.mxu0 0.0
    %1345 = vmatpush1.msra.mxu0 0.0
    %1346 = vmatprep.subr.mxu0 0.0
    %1347 = vmatpush1.msra.mxu0 0.0
    %1348 = vmatprep.subr.mxu0 0.0
    %1349 = vmatpush1.msra.mxu0 0.0
    %1350 = vmatprep.subr.mxu0 0.0
    %1351 = vmatpush1.msra.mxu0 0.0
    %1352 = vmatprep.subr.mxu0 0.0
    %1353 = vmatpush1.msra.mxu0 0.0
    %1354 = vmatprep.subr.mxu0 0.0
    %1355 = vmatpush1.msra.mxu0 0.0
    %1356 = vmatprep.subr.mxu0 0.0
    %1357 = vmatpush1.msra.mxu0 0.0
    %1358 = vmatprep.subr.mxu0 0.0
    %1359 = vmatpush1.msra.mxu0 0.0
    %1360 = vmatprep.subr.mxu0 0.0
    %1361 = vmatpush1.msra.mxu0 0.0
    %1362 = vmatprep.subr.mxu0 0.0
    %1363 = vmatpush1.msra.mxu0 0.0
    %1364 = vmatprep.subr.mxu0 0.0
    %1365 = vmatpush1.msra.mxu0 0.0
    %1366 = vmatprep.subr.mxu0 0.0
    %1367 = vmatpush1.msra.mxu0 0.0
    %1368 = vmatprep.subr.mxu0 0.0
    %1369 = vmatpush1.msra.mxu0 0.0
    %1370 = vmatprep.subr.mxu0 0.0
    %1371 = vmatpush1.msra.mxu0 0.0
    %1372 = vmatprep.subr.mxu0 0.0
    %1373 = vmatpush1.msra.mxu0 0.0
    %1374 = vmatprep.subr.mxu0 0.0
    %1375 = vmatpush1.msra.mxu0 0.0
    %1376 = vmatprep.subr.mxu0 0.0
    %1377 = vmatpush1.msra.mxu0 0.0
    %1378 = vmatprep.subr.mxu0 0.0
    %1379 = vmatpush1.msra.mxu0 0.0
    %1380 = vmatprep.subr.mxu0 0.0
    %1381 = vmatpush1.msra.mxu0 0.0
    %1382 = vmatprep.subr.mxu0 0.0
    %1383 = vmatpush1.msra.mxu0 0.0
    %1384 = vmatprep.subr.mxu0 0.0
    %1385 = vmatpush1.msra.mxu0 0.0
    %1386 = vmatprep.subr.mxu0 0.0
    %1387 = vmatpush1.msra.mxu0 0.0
    %1388 = vmatprep.subr.mxu0 0.0
    %1389 = vmatpush1.msra.mxu0 0.0
    %1390 = vmatprep.subr.mxu0 0.0
    %1391 = vmatpush1.msra.mxu0 0.0
    %1392 = vmatprep.mubr.f32.mxu0 0.0
    %v1393 = vand.u32 %v50, 4294901760
    %1394 = vmatmul.mubr.f32.gmra.mrb[0].mxu0 %v1393
    %v1395 = vpop.f32.mrb[0].mxu0
    %v1396 = vadd.f32 %v1283, %v1395
    %v1397 = vpop.f32.mrb[0].mxu0
    %v1398 = vadd.f32 %v1285, %v1397
    %1399 = vmatprep.mubr.f32.mxu0 0.0
    %v1400 = vand.u32 %v53, 4294901760
    %1401 = vmatmul.mubr.f32.gmra.mrb[0].mxu0 %v1400
    %v1402 = vpop.f32.mrb[0].mxu0
    %v1403 = vadd.f32 %v1294, %v1402
    %v1404 = vpop.f32.mrb[0].mxu0
    %v1405 = vadd.f32 %v1296, %v1404
    %1406 = vdwg.mxu0
    %v1407 = vand.u32 %v1200, 4294901760
    %v1408 = vsub.f32 %v1200, %v1407
    %1409 = vmatprep.subr.mxu0 %v1408
    %v1410 = vand.u32 %v1199, 4294901760
    %v1411 = vsub.f32 %v1199, %v1410
    %1412 = vmatpush1.msra.mxu0 %v1411
    %v1413 = vand.u32 %v1202, 4294901760
    %v1414 = vsub.f32 %v1202, %v1413
    %1415 = vmatprep.subr.mxu0 %v1414
    %v1416 = vand.u32 %v1201, 4294901760
    %v1417 = vsub.f32 %v1201, %v1416
    %1418 = vmatpush1.msra.mxu0 %v1417
    %v1419 = vand.u32 %v1204, 4294901760
    %v1420 = vsub.f32 %v1204, %v1419
    %1421 = vmatprep.subr.mxu0 %v1420
    %v1422 = vand.u32 %v1203, 4294901760
    %v1423 = vsub.f32 %v1203, %v1422
    %1424 = vmatpush1.msra.mxu0 %v1423
    %1425 = vmatprep.subr.mxu0 0.0
    %1426 = vmatpush1.msra.mxu0 0.0
    %1427 = vmatprep.subr.mxu0 0.0
    %1428 = vmatpush1.msra.mxu0 0.0
    %1429 = vmatprep.subr.mxu0 0.0
    %1430 = vmatpush1.msra.mxu0 0.0
    %1431 = vmatprep.subr.mxu0 0.0
    %1432 = vmatpush1.msra.mxu0 0.0
    %1433 = vmatprep.subr.mxu0 0.0
    %1434 = vmatpush1.msra.mxu0 0.0
    %1435 = vmatprep.subr.mxu0 0.0
    %1436 = vmatpush1.msra.mxu0 0.0
    %1437 = vmatprep.subr.mxu0 0.0
    %1438 = vmatpush1.msra.mxu0 0.0
    %1439 = vmatprep.subr.mxu0 0.0
    %1440 = vmatpush1.msra.mxu0 0.0
    %1441 = vmatprep.subr.mxu0 0.0
    %1442 = vmatpush1.msra.mxu0 0.0
    %1443 = vmatprep.subr.mxu0 0.0
    %1444 = vmatpush1.msra.mxu0 0.0
    %1445 = vmatprep.subr.mxu0 0.0
    %1446 = vmatpush1.msra.mxu0 0.0
    %1447 = vmatprep.subr.mxu0 0.0
    %1448 = vmatpush1.msra.mxu0 0.0
    %1449 = vmatprep.subr.mxu0 0.0
    %1450 = vmatpush1.msra.mxu0 0.0
    %1451 = vmatprep.subr.mxu0 0.0
    %1452 = vmatpush1.msra.mxu0 0.0
    %1453 = vmatprep.subr.mxu0 0.0
    %1454 = vmatpush1.msra.mxu0 0.0
    %1455 = vmatprep.subr.mxu0 0.0
    %1456 = vmatpush1.msra.mxu0 0.0
    %1457 = vmatprep.subr.mxu0 0.0
    %1458 = vmatpush1.msra.mxu0 0.0
    %1459 = vmatprep.subr.mxu0 0.0
    %1460 = vmatpush1.msra.mxu0 0.0
    %1461 = vmatprep.subr.mxu0 0.0
    %1462 = vmatpush1.msra.mxu0 0.0
    %1463 = vmatprep.subr.mxu0 0.0
    %1464 = vmatpush1.msra.mxu0 0.0
    %1465 = vmatprep.subr.mxu0 0.0
    %1466 = vmatpush1.msra.mxu0 0.0
    %1467 = vmatprep.subr.mxu0 0.0
    %1468 = vmatpush1.msra.mxu0 0.0
    %1469 = vmatprep.subr.mxu0 0.0
    %1470 = vmatpush1.msra.mxu0 0.0
    %1471 = vmatprep.subr.mxu0 0.0
    %1472 = vmatpush1.msra.mxu0 0.0
    %1473 = vmatprep.subr.mxu0 0.0
    %1474 = vmatpush1.msra.mxu0 0.0
    %1475 = vmatprep.subr.mxu0 0.0
    %1476 = vmatpush1.msra.mxu0 0.0
    %1477 = vmatprep.subr.mxu0 0.0
    %1478 = vmatpush1.msra.mxu0 0.0
    %1479 = vmatprep.subr.mxu0 0.0
    %1480 = vmatpush1.msra.mxu0 0.0
    %1481 = vmatprep.subr.mxu0 0.0
    %1482 = vmatpush1.msra.mxu0 0.0
    %1483 = vmatprep.mubr.f32.mxu0 0.0
    %v1484 = vand.u32 %v50, 4294901760
    %v1485 = vsub.f32 %v50, %v1484
    %1486 = vmatmul.mubr.f32.gmra.mrb[0].mxu0 %v1485
    %v1487 = vpop.f32.mrb[0].mxu0
    %v1488 = vadd.f32 %v1396, %v1487
    %v1489 = vpop.f32.mrb[0].mxu0
    %v1490 = vadd.f32 %v1398, %v1489
    %1491 = vmatprep.mubr.f32.mxu0 0.0
    %v1492 = vand.u32 %v53, 4294901760
    %v1493 = vsub.f32 %v53, %v1492
    %1494 = vmatmul.mubr.f32.gmra.mrb[0].mxu0 %v1493
    %v1495 = vpop.f32.mrb[0].mxu0
    %v1496 = vadd.f32 %v1403, %v1495
    %v1497 = vpop.f32.mrb[0].mxu0
    %v1498 = vadd.f32 %v1405, %v1497
    %1499 = vdwg.mxu0
    %v1500 = vand.u32 %v1200, 4294901760
    %1501 = vmatprep.subr.mxu0 %v1500
    %v1502 = vand.u32 %v1199, 4294901760
    %1503 = vmatpush1.msra.mxu0 %v1502
    %v1504 = vand.u32 %v1202, 4294901760
    %1505 = vmatprep.subr.mxu0 %v1504
    %v1506 = vand.u32 %v1201, 4294901760
    %1507 = vmatpush1.msra.mxu0 %v1506
    %v1508 = vand.u32 %v1204, 4294901760
    %1509 = vmatprep.subr.mxu0 %v1508
    %v1510 = vand.u32 %v1203, 4294901760
    %1511 = vmatpush1.msra.mxu0 %v1510
    %1512 = vmatprep.subr.mxu0 0.0
    %1513 = vmatpush1.msra.mxu0 0.0
    %1514 = vmatprep.subr.mxu0 0.0
    %1515 = vmatpush1.msra.mxu0 0.0
    %1516 = vmatprep.subr.mxu0 0.0
    %1517 = vmatpush1.msra.mxu0 0.0
    %1518 = vmatprep.subr.mxu0 0.0
    %1519 = vmatpush1.msra.mxu0 0.0
    %1520 = vmatprep.subr.mxu0 0.0
    %1521 = vmatpush1.msra.mxu0 0.0
    %1522 = vmatprep.subr.mxu0 0.0
    %1523 = vmatpush1.msra.mxu0 0.0
    %1524 = vmatprep.subr.mxu0 0.0
    %1525 = vmatpush1.msra.mxu0 0.0
    %1526 = vmatprep.subr.mxu0 0.0
    %1527 = vmatpush1.msra.mxu0 0.0
    %1528 = vmatprep.subr.mxu0 0.0
    %1529 = vmatpush1.msra.mxu0 0.0
    %1530 = vmatprep.subr.mxu0 0.0
    %1531 = vmatpush1.msra.mxu0 0.0
    %1532 = vmatprep.subr.mxu0 0.0
    %1533 = vmatpush1.msra.mxu0 0.0
    %1534 = vmatprep.subr.mxu0 0.0
    %1535 = vmatpush1.msra.mxu0 0.0
    %1536 = vmatprep.subr.mxu0 0.0
    %1537 = vmatpush1.msra.mxu0 0.0
    %1538 = vmatprep.subr.mxu0 0.0
    %1539 = vmatpush1.msra.mxu0 0.0
    %1540 = vmatprep.subr.mxu0 0.0
    %1541 = vmatpush1.msra.mxu0 0.0
    %1542 = vmatprep.subr.mxu0 0.0
    %1543 = vmatpush1.msra.mxu0 0.0
    %1544 = vmatprep.subr.mxu0 0.0
    %1545 = vmatpush1.msra.mxu0 0.0
    %1546 = vmatprep.subr.mxu0 0.0
    %1547 = vmatpush1.msra.mxu0 0.0
    %1548 = vmatprep.subr.mxu0 0.0
    %1549 = vmatpush1.msra.mxu0 0.0
    %1550 = vmatprep.subr.mxu0 0.0
    %1551 = vmatpush1.msra.mxu0 0.0
    %1552 = vmatprep.subr.mxu0 0.0
    %1553 = vmatpush1.msra.mxu0 0.0
    %1554 = vmatprep.subr.mxu0 0.0
    %1555 = vmatpush1.msra.mxu0 0.0
    %1556 = vmatprep.subr.mxu0 0.0
    %1557 = vmatpush1.msra.mxu0 0.0
    %1558 = vmatprep.subr.mxu0 0.0
    %1559 = vmatpush1.msra.mxu0 0.0
    %1560 = vmatprep.subr.mxu0 0.0
    %1561 = vmatpush1.msra.mxu0 0.0
    %1562 = vmatprep.subr.mxu0 0.0
    %1563 = vmatpush1.msra.mxu0 0.0
    %1564 = vmatprep.subr.mxu0 0.0
    %1565 = vmatpush1.msra.mxu0 0.0
    %1566 = vmatprep.subr.mxu0 0.0
    %1567 = vmatpush1.msra.mxu0 0.0
    %1568 = vmatprep.subr.mxu0 0.0
    %1569 = vmatpush1.msra.mxu0 0.0
    %1570 = vmatprep.mubr.f32.mxu0 0.0
    %v1571 = vand.u32 %v50, 4294901760
    %v1572 = vsub.f32 %v50, %v1571
    %v1573 = vand.u32 %v1572, 4294901760
    %1574 = vmatmul.mubr.f32.gmra.mrb[0].mxu0 %v1573
    %v1575 = vpop.f32.mrb[0].mxu0
    %v1576 = vadd.f32 %v1488, %v1575
    %v1577 = vpop.f32.mrb[0].mxu0
    %v1578 = vadd.f32 %v1490, %v1577
    %1579 = vmatprep.mubr.f32.mxu0 0.0
    %v1580 = vand.u32 %v53, 4294901760
    %v1581 = vsub.f32 %v53, %v1580
    %v1582 = vand.u32 %v1581, 4294901760
    %1583 = vmatmul.mubr.f32.gmra.mrb[0].mxu0 %v1582
    %v1584 = vpop.f32.mrb[0].mxu0
    %v1585 = vadd.f32 %v1496, %v1584
    %v1586 = vpop.f32.mrb[0].mxu0
    %v1587 = vadd.f32 %v1498, %v1586
    %1588 = vdwg.mxu0
    %v1589 = vand.u32 %v1200, 4294901760
    %v1590 = vsub.f32 %v1200, %v1589
    %v1591 = vand.u32 %v1590, 4294901760
    %1592 = vmatprep.subr.mxu0 %v1591
    %v1593 = vand.u32 %v1199, 4294901760
    %v1594 = vsub.f32 %v1199, %v1593
    %v1595 = vand.u32 %v1594, 4294901760
    %1596 = vmatpush1.msra.mxu0 %v1595
    %v1597 = vand.u32 %v1202, 4294901760
    %v1598 = vsub.f32 %v1202, %v1597
    %v1599 = vand.u32 %v1598, 4294901760
    %1600 = vmatprep.subr.mxu0 %v1599
    %v1601 = vand.u32 %v1201, 4294901760
    %v1602 = vsub.f32 %v1201, %v1601
    %v1603 = vand.u32 %v1602, 4294901760
    %1604 = vmatpush1.msra.mxu0 %v1603
    %v1605 = vand.u32 %v1204, 4294901760
    %v1606 = vsub.f32 %v1204, %v1605
    %v1607 = vand.u32 %v1606, 4294901760
    %1608 = vmatprep.subr.mxu0 %v1607
    %v1609 = vand.u32 %v1203, 4294901760
    %v1610 = vsub.f32 %v1203, %v1609
    %v1611 = vand.u32 %v1610, 4294901760
    %1612 = vmatpush1.msra.mxu0 %v1611
    %1613 = vmatprep.subr.mxu0 0.0
    %1614 = vmatpush1.msra.mxu0 0.0
    %1615 = vmatprep.subr.mxu0 0.0
    %1616 = vmatpush1.msra.mxu0 0.0
    %1617 = vmatprep.subr.mxu0 0.0
    %1618 = vmatpush1.msra.mxu0 0.0
    %1619 = vmatprep.subr.mxu0 0.0
    %1620 = vmatpush1.msra.mxu0 0.0
    %1621 = vmatprep.subr.mxu0 0.0
    %1622 = vmatpush1.msra.mxu0 0.0
    %1623 = vmatprep.subr.mxu0 0.0
    %1624 = vmatpush1.msra.mxu0 0.0
    %1625 = vmatprep.subr.mxu0 0.0
    %1626 = vmatpush1.msra.mxu0 0.0
    %1627 = vmatprep.subr.mxu0 0.0
    %1628 = vmatpush1.msra.mxu0 0.0
    %1629 = vmatprep.subr.mxu0 0.0
    %1630 = vmatpush1.msra.mxu0 0.0
    %1631 = vmatprep.subr.mxu0 0.0
    %1632 = vmatpush1.msra.mxu0 0.0
    %1633 = vmatprep.subr.mxu0 0.0
    %1634 = vmatpush1.msra.mxu0 0.0
    %1635 = vmatprep.subr.mxu0 0.0
    %1636 = vmatpush1.msra.mxu0 0.0
    %1637 = vmatprep.subr.mxu0 0.0
    %1638 = vmatpush1.msra.mxu0 0.0
    %1639 = vmatprep.subr.mxu0 0.0
    %1640 = vmatpush1.msra.mxu0 0.0
    %1641 = vmatprep.subr.mxu0 0.0
    %1642 = vmatpush1.msra.mxu0 0.0
    %1643 = vmatprep.subr.mxu0 0.0
    %1644 = vmatpush1.msra.mxu0 0.0
    %1645 = vmatprep.subr.mxu0 0.0
    %1646 = vmatpush1.msra.mxu0 0.0
    %1647 = vmatprep.subr.mxu0 0.0
    %1648 = vmatpush1.msra.mxu0 0.0
    %1649 = vmatprep.subr.mxu0 0.0
    %1650 = vmatpush1.msra.mxu0 0.0
    %1651 = vmatprep.subr.mxu0 0.0
    %1652 = vmatpush1.msra.mxu0 0.0
    %1653 = vmatprep.subr.mxu0 0.0
    %1654 = vmatpush1.msra.mxu0 0.0
    %1655 = vmatprep.subr.mxu0 0.0
    %1656 = vmatpush1.msra.mxu0 0.0
    %1657 = vmatprep.subr.mxu0 0.0
    %1658 = vmatpush1.msra.mxu0 0.0
    %1659 = vmatprep.subr.mxu0 0.0
    %1660 = vmatpush1.msra.mxu0 0.0
    %1661 = vmatprep.subr.mxu0 0.0
    %1662 = vmatpush1.msra.mxu0 0.0
    %1663 = vmatprep.subr.mxu0 0.0
    %1664 = vmatpush1.msra.mxu0 0.0
    %1665 = vmatprep.subr.mxu0 0.0
    %1666 = vmatpush1.msra.mxu0 0.0
    %1667 = vmatprep.subr.mxu0 0.0
    %1668 = vmatpush1.msra.mxu0 0.0
    %1669 = vmatprep.subr.mxu0 0.0
    %1670 = vmatpush1.msra.mxu0 0.0
    %1671 = vmatprep.mubr.f32.mxu0 0.0
    %v1672 = vand.u32 %v50, 4294901760
    %1673 = vmatmul.mubr.f32.gmra.mrb[0].mxu0 %v1672
    %v1674 = vpop.f32.mrb[0].mxu0
    %v1675 = vadd.f32 %v1576, %v1674
    %v1676 = vpop.f32.mrb[0].mxu0
    %v1677 = vadd.f32 %v1578, %v1676
    %1678 = vmatprep.mubr.f32.mxu0 0.0
    %v1679 = vand.u32 %v53, 4294901760
    %1680 = vmatmul.mubr.f32.gmra.mrb[0].mxu0 %v1679
    %v1681 = vpop.f32.mrb[0].mxu0
    %v1682 = vadd.f32 %v1585, %v1681
    %v1683 = vpop.f32.mrb[0].mxu0
    %v1684 = vadd.f32 %v1587, %v1683
    %1685 = vdwg.mxu0
    %v1686 = vand.u32 %v1200, 4294901760
    %1687 = vmatprep.subr.mxu0 %v1686
    %v1688 = vand.u32 %v1199, 4294901760
    %1689 = vmatpush1.msra.mxu0 %v1688
    %v1690 = vand.u32 %v1202, 4294901760
    %1691 = vmatprep.subr.mxu0 %v1690
    %v1692 = vand.u32 %v1201, 4294901760
    %1693 = vmatpush1.msra.mxu0 %v1692
    %v1694 = vand.u32 %v1204, 4294901760
    %1695 = vmatprep.subr.mxu0 %v1694
    %v1696 = vand.u32 %v1203, 4294901760
    %1697 = vmatpush1.msra.mxu0 %v1696
    %1698 = vmatprep.subr.mxu0 0.0
    %1699 = vmatpush1.msra.mxu0 0.0
    %1700 = vmatprep.subr.mxu0 0.0
    %1701 = vmatpush1.msra.mxu0 0.0
    %1702 = vmatprep.subr.mxu0 0.0
    %1703 = vmatpush1.msra.mxu0 0.0
    %1704 = vmatprep.subr.mxu0 0.0
    %1705 = vmatpush1.msra.mxu0 0.0
    %1706 = vmatprep.subr.mxu0 0.0
    %1707 = vmatpush1.msra.mxu0 0.0
    %1708 = vmatprep.subr.mxu0 0.0
    %1709 = vmatpush1.msra.mxu0 0.0
    %1710 = vmatprep.subr.mxu0 0.0
    %1711 = vmatpush1.msra.mxu0 0.0
    %1712 = vmatprep.subr.mxu0 0.0
    %1713 = vmatpush1.msra.mxu0 0.0
    %1714 = vmatprep.subr.mxu0 0.0
    %1715 = vmatpush1.msra.mxu0 0.0
    %1716 = vmatprep.subr.mxu0 0.0
    %1717 = vmatpush1.msra.mxu0 0.0
    %1718 = vmatprep.subr.mxu0 0.0
    %1719 = vmatpush1.msra.mxu0 0.0
    %1720 = vmatprep.subr.mxu0 0.0
    %1721 = vmatpush1.msra.mxu0 0.0
    %1722 = vmatprep.subr.mxu0 0.0
    %1723 = vmatpush1.msra.mxu0 0.0
    %1724 = vmatprep.subr.mxu0 0.0
    %1725 = vmatpush1.msra.mxu0 0.0
    %1726 = vmatprep.subr.mxu0 0.0
    %1727 = vmatpush1.msra.mxu0 0.0
    %1728 = vmatprep.subr.mxu0 0.0
    %1729 = vmatpush1.msra.mxu0 0.0
    %1730 = vmatprep.subr.mxu0 0.0
    %1731 = vmatpush1.msra.mxu0 0.0
    %1732 = vmatprep.subr.mxu0 0.0
    %1733 = vmatpush1.msra.mxu0 0.0
    %1734 = vmatprep.subr.mxu0 0.0
    %1735 = vmatpush1.msra.mxu0 0.0
    %1736 = vmatprep.subr.mxu0 0.0
    %1737 = vmatpush1.msra.mxu0 0.0
    %1738 = vmatprep.subr.mxu0 0.0
    %1739 = vmatpush1.msra.mxu0 0.0
    %1740 = vmatprep.subr.mxu0 0.0
    %1741 = vmatpush1.msra.mxu0 0.0
    %1742 = vmatprep.subr.mxu0 0.0
    %1743 = vmatpush1.msra.mxu0 0.0
    %1744 = vmatprep.subr.mxu0 0.0
    %1745 = vmatpush1.msra.mxu0 0.0
    %1746 = vmatprep.subr.mxu0 0.0
    %1747 = vmatpush1.msra.mxu0 0.0
    %1748 = vmatprep.subr.mxu0 0.0
    %1749 = vmatpush1.msra.mxu0 0.0
    %1750 = vmatprep.subr.mxu0 0.0
    %1751 = vmatpush1.msra.mxu0 0.0
    %1752 = vmatprep.subr.mxu0 0.0
    %1753 = vmatpush1.msra.mxu0 0.0
    %1754 = vmatprep.subr.mxu0 0.0
    %1755 = vmatpush1.msra.mxu0 0.0
    %1756 = vmatprep.mubr.f32.mxu0 0.0
    %v1757 = vand.u32 %v50, 4294901760
    %1758 = vmatmul.mubr.f32.gmra.mrb[0].mxu0 %v1757
    %v1759 = vpop.f32.mrb[0].mxu0
    %v1760 = vadd.f32 %v1675, %v1759
    %v1761 = vpop.f32.mrb[0].mxu0
    %v1762 = vadd.f32 %v1677, %v1761
    %1763 = vmatprep.mubr.f32.mxu0 0.0
    %v1764 = vand.u32 %v53, 4294901760
    %1765 = vmatmul.mubr.f32.gmra.mrb[0].mxu0 %v1764
    %v1766 = vpop.f32.mrb[0].mxu0
    %v1767 = vadd.f32 %v1682, %v1766
    %v1768 = vpop.f32.mrb[0].mxu0
    %v1769 = vadd.f32 %v1684, %v1768
    %1770 = vdwg.mxu0
    %v1771 = vmul.f32 %v610, %v610
    %v1772 = vmul.f32 %v612, %v612
    %v1773 = vmul.f32 %v617, %v617
    %v1774 = vmul.f32 %v619, %v619
    %v1775 = vmul.f32 %v1185, %v1185
    %v1776 = vmul.f32 %v1187, %v1187
    %v1777 = vmul.f32 %v1192, %v1192
    %v1778 = vmul.f32 %v1194, %v1194
    %v1779 = vadd.f32 %v1771, %v1775
    %v1780 = vadd.f32 %v1772, %v1776
    %v1781 = vadd.f32 %v1773, %v1777
    %v1782 = vadd.f32 %v1774, %v1778
    %v1783 = vmul.f32 %v1760, %v1760
    %v1784 = vmul.f32 %v1762, %v1762
    %v1785 = vmul.f32 %v1767, %v1767
    %v1786 = vmul.f32 %v1769, %v1769
    %v1787 = vadd.f32 %v1779, %v1783
    %v1788 = vadd.f32 %v1780, %v1784
    %v1789 = vadd.f32 %v1781, %v1785
    %v1790 = vadd.f32 %v1782, %v1786
    %v1791 = vrsqrt.pop %v1787
    %v1792 = vmul.f32 %v1787, %v1791
    %vm1793 = vcmp.eq.f32.partialorder %v1787, inf
    %v1794 = vsel %vm1793, %v1787, %v1792
    %vm1795 = vcmp.eq.f32.partialorder %v1787, 0.0
    %v1796 = vand.u32 %v1787, 2147483648
    %v1797 = vsel %vm1795, %v1796, %v1794
    %v1798 = vrsqrt.pop %v1788
    %v1799 = vmul.f32 %v1788, %v1798
    %vm1800 = vcmp.eq.f32.partialorder %v1788, inf
    %v1801 = vsel %vm1800, %v1788, %v1799
    %vm1802 = vcmp.eq.f32.partialorder %v1788, 0.0
    %v1803 = vand.u32 %v1788, 2147483648
    %v1804 = vsel %vm1802, %v1803, %v1801
    %v1805 = vrsqrt.pop %v1789
    %v1806 = vmul.f32 %v1789, %v1805
    %vm1807 = vcmp.eq.f32.partialorder %v1789, inf
    %v1808 = vsel %vm1807, %v1789, %v1806
    %vm1809 = vcmp.eq.f32.partialorder %v1789, 0.0
    %v1810 = vand.u32 %v1789, 2147483648
    %v1811 = vsel %vm1809, %v1810, %v1808
    %v1812 = vrsqrt.pop %v1790
    %v1813 = vmul.f32 %v1790, %v1812
    %vm1814 = vcmp.eq.f32.partialorder %v1790, inf
    %v1815 = vsel %vm1814, %v1790, %v1813
    %vm1816 = vcmp.eq.f32.partialorder %v1790, 0.0
    %v1817 = vand.u32 %v1790, 2147483648
    %v1818 = vsel %vm1816, %v1817, %v1815
    %v1819 = vsub.f32 %v1797, %v1811
    %v1820 = vsub.f32 %v1804, %v1818
    %v1821 = vand.u32 2147483647, %v1819
    %v1822 = vand.u32 2147483647, %v1820
    %v1823 = vadd.f32 %v1821, 0.0
    %v1824 = vadd.f32 %v1822, 0.0
    %v1825 = vadd.f32 %v1823, %v1824
    %1826 = vst [vmem:[#allocation7] sm:$0xff] %v1825
    // Predicated region
    $region18: #{tpu_custom_call.1} parent=1 // pred_check
      _
    $region19: #{tpu_custom_call.1} parent=1 // pred_check_branch
      %1828 = sbr.rel (0) target = $region21
    $region20: #{tpu_custom_call.1} parent=1 // pred_region
      %s1830 = ssub.s32 128, 128
      %1831 = vsyncadd [#allocation4], %s1830
      %s1833 = sshll.u32 [#allocation7], 4
      %s1834 = int_to_ptr.vmem [resolvable:$true] %s1833
      %1836 = dma.vmem_to_hbm [thread:$0]  %s1834, 128, %s2, [#allocation4]
    $region21: #{tpu_custom_call.1} parent=1 // pred_fallthru
      _
    // Predicated region
    $region22: #{tpu_custom_call.1} parent=1 // pred_check
      _
    $region23: #{tpu_custom_call.1} parent=1 // pred_check_branch
      %1838 = sbr.rel (0) target = $region25
    $region24: #{tpu_custom_call.1} parent=1 // pred_region
      %1839 = dma.done [#allocation4], 128
    $region25: #{tpu_custom_call.1} parent=1 // pred_fallthru
      _
    %1840 = vsyncpa [#allocation3], 1
    %1841 = vsyncpa [#allocation6], 1
    %1842 = vsyncpa [#allocation4], 1

</llo_original>
